<compile_context>
chip_gen: v6e
topology: v6e:2x2x1
jax: 0.10.0
libtpu: 0.0.40
codegen_flags: <defaults>
</compile_context>

<pallas_src>
import jax
import jax.numpy as jnp
from jax.experimental import pallas as pl
from jax.experimental.pallas import tpu as pltpu


def _round_up(x, m):
    return (x + m - 1) // m * m


def discriminator_kernel(y_ref, w1_ref, b1_ref, w2_ref, b2_ref, w3_ref, b3_ref, o_ref):
    """Fused 3-layer MLP + sigmoid. bf16 MXU matmuls, f32 accumulation / VPU math."""
    x = y_ref[...]                                                # (block_b, in_pad) bf16

    # Layer 1: Linear(2*y_dim, y_dim) + LeakyReLU(0.2)
    h = jnp.dot(x, w1_ref[...], preferred_element_type=jnp.float32) + b1_ref[...]
    h = jnp.where(h >= 0, h, 0.2 * h)

    # Layer 2: Linear(y_dim, y_dim) + LeakyReLU(0.2)
    h = jnp.dot(h.astype(jnp.bfloat16), w2_ref[...],
                preferred_element_type=jnp.float32) + b2_ref[...]
    h = jnp.where(h >= 0, h, 0.2 * h)

    # Layer 3: Linear(y_dim, 1) + Sigmoid   (logical output occupies lane 0)
    h = jnp.dot(h.astype(jnp.bfloat16), w3_ref[...],
                preferred_element_type=jnp.float32) + b3_ref[...]
    o_ref[...] = (1.0 / (1.0 + jnp.exp(-h))).astype(o_ref.dtype)


def _pick_block_b(batch, in_pad, hid_pad, out_pad, *,
                  vmem_budget_bytes=32 * 1024 * 1024,
                  min_tiles=4, max_block=1024):
    """Largest batch tile (multiple of 8) that fits the VMEM working budget while
    keeping >= min_tiles grid steps (pipelining + v7x megacore sharding)."""
    # Resident parameters, assuming double-buffered worst case: bf16 weights + f32 biases.
    weight_bytes = 2 * 2 * (in_pad * hid_pad + hid_pad * hid_pad + hid_pad * out_pad)
    bias_bytes = 2 * 4 * (2 * hid_pad + out_pad)
    avail = max(vmem_budget_bytes - weight_bytes - bias_bytes, 1 << 20)
    # Per batch-row cost: double-buffered bf16 input tile + f32 output tile,
    # plus f32 in-kernel intermediates (two hidden activations + pre-sigmoid).
    per_row = (2 * 2 * in_pad) + (2 * 4 * out_pad) + 4 * (2 * hid_pad + out_pad)
    vmem_rows = max(8, (avail // per_row) // 8 * 8)
    target = _round_up(max(8, -(-batch // min_tiles)), 8)
    return int(min(vmem_rows, max_block, target))


def _build_call(*, block_b, b_pad, in_pad, hid_pad, out_pad,
                single_buffer_weights, vmem_limit_bytes):
    grid = (b_pad // block_b,)

    def const_spec(shape):
        # Parameters: block index never changes across the grid, so a second
        # pipeline buffer is pure VMEM waste -> request single buffering.
        if single_buffer_weights:
            return pl.BlockSpec(shape, lambda i: (0, 0), pipeline_mode=pl.Buffered(1))
        return pl.BlockSpec(shape, lambda i: (0, 0))

    matmul_flops = 2 * b_pad * (in_pad * hid_pad + hid_pad * hid_pad + hid_pad * out_pad)
    bytes_accessed = (
        2 * b_pad * in_pad                                                 # bf16 input
        + 4 * b_pad * out_pad                                              # f32 output slab
        + 2 * (in_pad * hid_pad + hid_pad * hid_pad + hid_pad * out_pad)   # bf16 weights
        + 4 * (2 * hid_pad + out_pad)                                      # f32 biases
    )

    return pl.pallas_call(
        discriminator_kernel,
        out_shape=jax.ShapeDtypeStruct((b_pad, out_pad), jnp.float32),
        grid_spec=pltpu.PrefetchScalarGridSpec(
            num_scalar_prefetch=0,
            grid=grid,
            in_specs=[
                pl.BlockSpec((block_b, in_pad), lambda i: (i, 0)),   # activations (tiled)
                const_spec((in_pad, hid_pad)),                       # w1
                const_spec((1, hid_pad)),                            # b1
                const_spec((hid_pad, hid_pad)),                      # w2
                const_spec((1, hid_pad)),                            # b2
                const_spec((hid_pad, out_pad)),                      # w3
                const_spec((1, out_pad)),                            # b3
            ],
            out_specs=pl.BlockSpec((block_b, out_pad), lambda i: (i, 0)),
        ),
        compiler_params=pltpu.CompilerParams(
            dimension_semantics=("parallel",),
            vmem_limit_bytes=vmem_limit_bytes,
        ),
        cost_estimate=pl.CostEstimate(
            flops=int(matmul_flops),
            transcendentals=int(b_pad * out_pad),
            bytes_accessed=int(bytes_accessed),
        ),
    )


def discriminator_forward(y, params, *, block_b=None,
                          vmem_limit_bytes=48 * 1024 * 1024):
    """Run the fused Discriminator kernel.

    y:      (B, 2*y_dim) float32
    params: dict with w1 (2y, y), b1 (1, y), w2 (y, y), b2 (1, y), w3 (y, 1),
            b3 (1, 1) -- weights stored (in_features, out_features), i.e. the
            transpose of PyTorch nn.Linear's (out, in) storage.
    Returns (B,) float32 sigmoid probabilities.  (PyTorch's .squeeze() would
    additionally drop the batch dim when B == 1.)
    """
    y = jnp.asarray(y, jnp.float32)
    B, in_dim = y.shape
    y_dim = params["w1"].shape[1]
    assert in_dim == 2 * y_dim, (in_dim, y_dim)

    # Lane-dense padded feature dims (multiples of 128).
    in_pad = _round_up(in_dim, 128)
    hid_pad = _round_up(y_dim, 128)
    out_pad = 128   # logical output dim is 1; lane 0 holds it

    if block_b is None:
        block_b = _pick_block_b(B, in_pad, hid_pad, out_pad)
    block_b = max(8, _round_up(block_b, 8))
    b_pad = _round_up(max(B, 1), block_b)

    # Pad + cast parameters once at the pallas_call boundary (bf16 weights, f32 biases).
    def pad_w(w, r, c):
        return jnp.zeros((r, c), jnp.bfloat16).at[: w.shape[0], : w.shape[1]].set(
            w.astype(jnp.bfloat16))

    def pad_b(b, c):
        b = jnp.asarray(b, jnp.float32).reshape(1, -1)
        return jnp.zeros((1, c), jnp.float32).at[:, : b.shape[1]].set(b)

    w1 = pad_w(params["w1"], in_pad, hid_pad)
    w2 = pad_w(params["w2"], hid_pad, hid_pad)
    w3 = pad_w(params["w3"], hid_pad, out_pad)
    b1 = pad_b(params["b1"], hid_pad)
    b2 = pad_b(params["b2"], hid_pad)
    b3 = pad_b(params["b3"], out_pad)

    # Zero-pad the batch so every tile is full (no masked partial stores, no
    # garbage rows in the matmuls) and feed bf16 straight into the MXU.
    yp = jnp.zeros((b_pad, in_pad), jnp.bfloat16).at[:B, :in_dim].set(
        y.astype(jnp.bfloat16))

    args = (yp, w1, b1, w2, b2, w3, b3)
    kwargs = dict(block_b=block_b, b_pad=b_pad, in_pad=in_pad, hid_pad=hid_pad,
                  out_pad=out_pad, vmem_limit_bytes=vmem_limit_bytes)
    try:
        out = _build_call(single_buffer_weights=True, **kwargs)(*args)
        out = jax.block_until_ready(out)
    except Exception:
        # pipeline_mode=pl.Buffered(1) unsupported on this jax build; the default
        # double-buffered weights only cost a small amount of extra VMEM.
        out = _build_call(single_buffer_weights=False, **kwargs)(*args)
    return out[:B, 0]


def init_params(key, y_dim):
    """Mimics nn.Linear default init (uniform +/- 1/sqrt(fan_in)); weights stored
    as (in_features, out_features)."""
    def linear(k, fan_in, fan_out):
        kw, kb = jax.random.split(k)
        bound = 1.0 / jnp.sqrt(jnp.float32(fan_in))
        w = jax.random.uniform(kw, (fan_in, fan_out), jnp.float32, -bound, bound)
        b = jax.random.uniform(kb, (1, fan_out), jnp.float32, -bound, bound)
        return w, b

    k1, k2, k3 = jax.random.split(key, 3)
    w1, b1 = linear(k1, 2 * y_dim, y_dim)
    w2, b2 = linear(k2, y_dim, y_dim)
    w3, b3 = linear(k3, y_dim, 1)
    return {"w1": w1, "b1": b1, "w2": w2, "b2": b2, "w3": w3, "b3": b3}


def discriminator_reference(y, p):
    """Pure-JAX reference mirroring the kernel's precision
    (bf16 matmul inputs, f32 accumulation and activations)."""
    def dense(x, w, b):
        return jnp.dot(x.astype(jnp.bfloat16), w.astype(jnp.bfloat16),
                       preferred_element_type=jnp.float32) + b

    h = dense(y, p["w1"], p["b1"])
    h = jnp.where(h >= 0, h, 0.2 * h)
    h = dense(h, p["w2"], p["b2"])
    h = jnp.where(h >= 0, h, 0.2 * h)
    h = dense(h, p["w3"], p["b3"])
    return (1.0 / (1.0 + jnp.exp(-h)))[:, 0]


if __name__ == "__main__":
    key = jax.random.PRNGKey(0)
    k_in, k_par = jax.random.split(key)

    y_dim, B = 32, 64
    y = jax.random.normal(k_in, (B, 2 * y_dim), dtype=jnp.float32)
    params = init_params(k_par, y_dim)

    out = discriminator_forward(y, params)
    out = jax.block_until_ready(out)

    ref = discriminator_reference(y, params)
    assert out.shape == (B,), out.shape
    assert bool(jnp.all(jnp.isfinite(out)))
    assert jnp.allclose(out, ref, atol=1e-2, rtol=1e-2), float(
        jnp.max(jnp.abs(out - ref)))

    print("KERNEL_OK")
</pallas_src>

<mosaic_0001>
module attributes {stable_mosaic.version = 11 : i64} {
  func.func @discriminator_kernel(%arg0: i32, %arg1: memref<16x128xbf16, #tpu.memory_space<vmem>>, %arg2: memref<128x128xbf16, #tpu.memory_space<vmem>>, %arg3: memref<1x128xf32, #tpu.memory_space<vmem>>, %arg4: memref<128x128xbf16, #tpu.memory_space<vmem>>, %arg5: memref<1x128xf32, #tpu.memory_space<vmem>>, %arg6: memref<128x128xbf16, #tpu.memory_space<vmem>>, %arg7: memref<1x128xf32, #tpu.memory_space<vmem>>, %arg8: memref<16x128xf32, #tpu.memory_space<vmem>>) attributes {dimension_semantics = [#tpu.dimension_semantics<parallel>], iteration_bounds = array<i64: 4>, scalar_prefetch = 0 : i64, scratch_operands = 0 : i64, tpu.core_type = #tpu.core_type<tc>, window_params = [{transform_indices = @transform_0, window_bounds = array<i64: 16, 128>}, {pipeline_mode = #tpu.pipeline_mode<synchronous>, transform_indices = @transform_1, window_bounds = array<i64: 128, 128>}, {pipeline_mode = #tpu.pipeline_mode<synchronous>, transform_indices = @transform_2, window_bounds = array<i64: 1, 128>}, {pipeline_mode = #tpu.pipeline_mode<synchronous>, transform_indices = @transform_3, window_bounds = array<i64: 128, 128>}, {pipeline_mode = #tpu.pipeline_mode<synchronous>, transform_indices = @transform_4, window_bounds = array<i64: 1, 128>}, {pipeline_mode = #tpu.pipeline_mode<synchronous>, transform_indices = @transform_5, window_bounds = array<i64: 128, 128>}, {pipeline_mode = #tpu.pipeline_mode<synchronous>, transform_indices = @transform_6, window_bounds = array<i64: 1, 128>}, {transform_indices = @transform_7, window_bounds = array<i64: 16, 128>}]} {
    %c0 = arith.constant 0 : index
    %c0_0 = arith.constant 0 : index
    %0 = vector.load %arg1[%c0, %c0_0] : memref<16x128xbf16, #tpu.memory_space<vmem>>, vector<16x128xbf16>
    %c0_1 = arith.constant 0 : index
    %c0_2 = arith.constant 0 : index
    %1 = vector.load %arg2[%c0_1, %c0_2] : memref<128x128xbf16, #tpu.memory_space<vmem>>, vector<128x128xbf16>
    %cst = arith.constant dense<0.000000e+00> : vector<16x128xf32>
    %2 = tpu.matmul %0, %1, %cst {dimension_numbers = #tpu.dot_dimension_numbers<[1], [0], [0], [1], [0, 0, 1, 1], [], []>} : vector<16x128xbf16>, vector<128x128xbf16>, vector<16x128xf32> -> vector<16x128xf32>
    %c0_3 = arith.constant 0 : index
    %c0_4 = arith.constant 0 : index
    %3 = vector.load %arg3[%c0_3, %c0_4] : memref<1x128xf32, #tpu.memory_space<vmem>>, vector<1x128xf32>
    %4 = vector.broadcast %3 : vector<1x128xf32> to vector<16x128xf32>
    %5 = arith.addf %2, %4 : vector<16x128xf32>
    %cst_5 = arith.constant 0.000000e+00 : f32
    %6 = vector.broadcast %cst_5 : f32 to vector<16x128xf32>
    %7 = arith.cmpf oge, %5, %6 : vector<16x128xf32>
    %cst_6 = arith.constant 2.000000e-01 : f32
    %8 = vector.broadcast %cst_6 : f32 to vector<16x128xf32>
    %9 = arith.mulf %8, %5 : vector<16x128xf32>
    %10 = arith.select %7, %5, %9 : vector<16x128xi1>, vector<16x128xf32>
    %11 = arith.truncf %10 : vector<16x128xf32> to vector<16x128xbf16>
    %c0_7 = arith.constant 0 : index
    %c0_8 = arith.constant 0 : index
    %12 = vector.load %arg4[%c0_7, %c0_8] : memref<128x128xbf16, #tpu.memory_space<vmem>>, vector<128x128xbf16>
    %cst_9 = arith.constant dense<0.000000e+00> : vector<16x128xf32>
    %13 = tpu.matmul %11, %12, %cst_9 {dimension_numbers = #tpu.dot_dimension_numbers<[1], [0], [0], [1], [0, 0, 1, 1], [], []>} : vector<16x128xbf16>, vector<128x128xbf16>, vector<16x128xf32> -> vector<16x128xf32>
    %c0_10 = arith.constant 0 : index
    %c0_11 = arith.constant 0 : index
    %14 = vector.load %arg5[%c0_10, %c0_11] : memref<1x128xf32, #tpu.memory_space<vmem>>, vector<1x128xf32>
    %15 = vector.broadcast %14 : vector<1x128xf32> to vector<16x128xf32>
    %16 = arith.addf %13, %15 : vector<16x128xf32>
    %cst_12 = arith.constant 0.000000e+00 : f32
    %17 = vector.broadcast %cst_12 : f32 to vector<16x128xf32>
    %18 = arith.cmpf oge, %16, %17 : vector<16x128xf32>
    %cst_13 = arith.constant 2.000000e-01 : f32
    %19 = vector.broadcast %cst_13 : f32 to vector<16x128xf32>
    %20 = arith.mulf %19, %16 : vector<16x128xf32>
    %21 = arith.select %18, %16, %20 : vector<16x128xi1>, vector<16x128xf32>
    %22 = arith.truncf %21 : vector<16x128xf32> to vector<16x128xbf16>
    %c0_14 = arith.constant 0 : index
    %c0_15 = arith.constant 0 : index
    %23 = vector.load %arg6[%c0_14, %c0_15] : memref<128x128xbf16, #tpu.memory_space<vmem>>, vector<128x128xbf16>
    %cst_16 = arith.constant dense<0.000000e+00> : vector<16x128xf32>
    %24 = tpu.matmul %22, %23, %cst_16 {dimension_numbers = #tpu.dot_dimension_numbers<[1], [0], [0], [1], [0, 0, 1, 1], [], []>} : vector<16x128xbf16>, vector<128x128xbf16>, vector<16x128xf32> -> vector<16x128xf32>
    %c0_17 = arith.constant 0 : index
    %c0_18 = arith.constant 0 : index
    %25 = vector.load %arg7[%c0_17, %c0_18] : memref<1x128xf32, #tpu.memory_space<vmem>>, vector<1x128xf32>
    %26 = vector.broadcast %25 : vector<1x128xf32> to vector<16x128xf32>
    %27 = arith.addf %24, %26 : vector<16x128xf32>
    %cst_19 = arith.constant 0.000000e+00 : f32
    %28 = vector.broadcast %cst_19 : f32 to vector<16x128xf32>
    %29 = arith.subf %28, %27 : vector<16x128xf32>
    %30 = math.exp %29 : vector<16x128xf32>
    %cst_20 = arith.constant 1.000000e+00 : f32
    %31 = vector.broadcast %cst_20 : f32 to vector<16x128xf32>
    %32 = arith.addf %31, %30 : vector<16x128xf32>
    %cst_21 = arith.constant 1.000000e+00 : f32
    %33 = vector.broadcast %cst_21 : f32 to vector<16x128xf32>
    %34 = arith.divf %33, %32 : vector<16x128xf32>
    %c0_22 = arith.constant 0 : index
    %c0_23 = arith.constant 0 : index
    %35 = vector.load %arg8[%c0_22, %c0_23] : memref<16x128xf32, #tpu.memory_space<vmem>>, vector<16x128xf32>
    tpu.vector_store %arg8[%c0_22, %c0_23], %34 {strides = array<i32>} : memref<16x128xf32, #tpu.memory_space<vmem>>, vector<16x128xf32>,
    return
  }
  func.func @transform_0(%arg0: i32) -> (i32, i32) {
    %c0_i32 = arith.constant 0 : i32
    %c0_i32_0 = arith.constant 0 : i32
    return %arg0, %c0_i32 : i32, i32
  }
  func.func @transform_1(%arg0: i32) -> (i32, i32) {
    %c0_i32 = arith.constant 0 : i32
    %c0_i32_0 = arith.constant 0 : i32
    %c0_i32_1 = arith.constant 0 : i32
    return %c0_i32, %c0_i32_0 : i32, i32
  }
  func.func @transform_2(%arg0: i32) -> (i32, i32) {
    %c0_i32 = arith.constant 0 : i32
    %c0_i32_0 = arith.constant 0 : i32
    %c0_i32_1 = arith.constant 0 : i32
    return %c0_i32, %c0_i32_0 : i32, i32
  }
  func.func @transform_3(%arg0: i32) -> (i32, i32) {
    %c0_i32 = arith.constant 0 : i32
    %c0_i32_0 = arith.constant 0 : i32
    %c0_i32_1 = arith.constant 0 : i32
    return %c0_i32, %c0_i32_0 : i32, i32
  }
  func.func @transform_4(%arg0: i32) -> (i32, i32) {
    %c0_i32 = arith.constant 0 : i32
    %c0_i32_0 = arith.constant 0 : i32
    %c0_i32_1 = arith.constant 0 : i32
    return %c0_i32, %c0_i32_0 : i32, i32
  }
  func.func @transform_5(%arg0: i32) -> (i32, i32) {
    %c0_i32 = arith.constant 0 : i32
    %c0_i32_0 = arith.constant 0 : i32
    %c0_i32_1 = arith.constant 0 : i32
    return %c0_i32, %c0_i32_0 : i32, i32
  }
  func.func @transform_6(%arg0: i32) -> (i32, i32) {
    %c0_i32 = arith.constant 0 : i32
    %c0_i32_0 = arith.constant 0 : i32
    %c0_i32_1 = arith.constant 0 : i32
    return %c0_i32, %c0_i32_0 : i32, i32
  }
  func.func @transform_7(%arg0: i32) -> (i32, i32) {
    %c0_i32 = arith.constant 0 : i32
    %c0_i32_0 = arith.constant 0 : i32
    return %arg0, %c0_i32 : i32, i32
  }
}

module attributes {stable_mosaic.version = 11 : i64} {
  func.func @discriminator_kernel(%arg0: i32, %arg1: memref<16x128xbf16, #tpu.memory_space<vmem>>, %arg2: memref<128x128xbf16, #tpu.memory_space<vmem>>, %arg3: memref<1x128xf32, #tpu.memory_space<vmem>>, %arg4: memref<128x128xbf16, #tpu.memory_space<vmem>>, %arg5: memref<1x128xf32, #tpu.memory_space<vmem>>, %arg6: memref<128x128xbf16, #tpu.memory_space<vmem>>, %arg7: memref<1x128xf32, #tpu.memory_space<vmem>>, %arg8: memref<16x128xf32, #tpu.memory_space<vmem>>) attributes {dimension_semantics = [#tpu.dimension_semantics<parallel>], iteration_bounds = array<i64: 4>, scalar_prefetch = 0 : i64, scratch_operands = 0 : i64, tpu.core_type = #tpu.core_type<tc>, window_params = [{transform_indices = @transform_0, window_bounds = array<i64: 16, 128>}, {pipeline_mode = #tpu.pipeline_mode<synchronous>, transform_indices = @transform_1, window_bounds = array<i64: 128, 128>}, {pipeline_mode = #tpu.pipeline_mode<synchronous>, transform_indices = @transform_2, window_bounds = array<i64: 1, 128>}, {pipeline_mode = #tpu.pipeline_mode<synchronous>, transform_indices = @transform_3, window_bounds = array<i64: 128, 128>}, {pipeline_mode = #tpu.pipeline_mode<synchronous>, transform_indices = @transform_4, window_bounds = array<i64: 1, 128>}, {pipeline_mode = #tpu.pipeline_mode<synchronous>, transform_indices = @transform_5, window_bounds = array<i64: 128, 128>}, {pipeline_mode = #tpu.pipeline_mode<synchronous>, transform_indices = @transform_6, window_bounds = array<i64: 1, 128>}, {transform_indices = @transform_7, window_bounds = array<i64: 16, 128>}]} {
    %c0 = arith.constant 0 : index
    %c0_0 = arith.constant 0 : index
    %0 = vector.load %arg1[%c0, %c0_0] : memref<16x128xbf16, #tpu.memory_space<vmem>>, vector<16x128xbf16>
    %c0_1 = arith.constant 0 : index
    %c0_2 = arith.constant 0 : index
    %1 = vector.load %arg2[%c0_1, %c0_2] : memref<128x128xbf16, #tpu.memory_space<vmem>>, vector<128x128xbf16>
    %cst = arith.constant dense<0.000000e+00> : vector<16x128xf32>
    %2 = tpu.matmul %0, %1, %cst {dimension_numbers = #tpu.dot_dimension_numbers<[1], [0], [0], [1], [0, 0, 1, 1], [], []>} : vector<16x128xbf16>, vector<128x128xbf16>, vector<16x128xf32> -> vector<16x128xf32>
    %c0_3 = arith.constant 0 : index
    %c0_4 = arith.constant 0 : index
    %3 = vector.load %arg3[%c0_3, %c0_4] : memref<1x128xf32, #tpu.memory_space<vmem>>, vector<1x128xf32>
    %4 = vector.broadcast %3 : vector<1x128xf32> to vector<16x128xf32>
    %5 = arith.addf %2, %4 : vector<16x128xf32>
    %cst_5 = arith.constant 0.000000e+00 : f32
    %6 = vector.broadcast %cst_5 : f32 to vector<16x128xf32>
    %7 = arith.cmpf oge, %5, %6 : vector<16x128xf32>
    %cst_6 = arith.constant 2.000000e-01 : f32
    %8 = vector.broadcast %cst_6 : f32 to vector<16x128xf32>
    %9 = arith.mulf %8, %5 : vector<16x128xf32>
    %10 = arith.select %7, %5, %9 : vector<16x128xi1>, vector<16x128xf32>
    %11 = arith.truncf %10 : vector<16x128xf32> to vector<16x128xbf16>
    %c0_7 = arith.constant 0 : index
    %c0_8 = arith.constant 0 : index
    %12 = vector.load %arg4[%c0_7, %c0_8] : memref<128x128xbf16, #tpu.memory_space<vmem>>, vector<128x128xbf16>
    %cst_9 = arith.constant dense<0.000000e+00> : vector<16x128xf32>
    %13 = tpu.matmul %11, %12, %cst_9 {dimension_numbers = #tpu.dot_dimension_numbers<[1], [0], [0], [1], [0, 0, 1, 1], [], []>} : vector<16x128xbf16>, vector<128x128xbf16>, vector<16x128xf32> -> vector<16x128xf32>
    %c0_10 = arith.constant 0 : index
    %c0_11 = arith.constant 0 : index
    %14 = vector.load %arg5[%c0_10, %c0_11] : memref<1x128xf32, #tpu.memory_space<vmem>>, vector<1x128xf32>
    %15 = vector.broadcast %14 : vector<1x128xf32> to vector<16x128xf32>
    %16 = arith.addf %13, %15 : vector<16x128xf32>
    %cst_12 = arith.constant 0.000000e+00 : f32
    %17 = vector.broadcast %cst_12 : f32 to vector<16x128xf32>
    %18 = arith.cmpf oge, %16, %17 : vector<16x128xf32>
    %cst_13 = arith.constant 2.000000e-01 : f32
    %19 = vector.broadcast %cst_13 : f32 to vector<16x128xf32>
    %20 = arith.mulf %19, %16 : vector<16x128xf32>
    %21 = arith.select %18, %16, %20 : vector<16x128xi1>, vector<16x128xf32>
    %22 = arith.truncf %21 : vector<16x128xf32> to vector<16x128xbf16>
    %c0_14 = arith.constant 0 : index
    %c0_15 = arith.constant 0 : index
    %23 = vector.load %arg6[%c0_14, %c0_15] : memref<128x128xbf16, #tpu.memory_space<vmem>>, vector<128x128xbf16>
    %cst_16 = arith.constant dense<0.000000e+00> : vector<16x128xf32>
    %24 = tpu.matmul %22, %23, %cst_16 {dimension_numbers = #tpu.dot_dimension_numbers<[1], [0], [0], [1], [0, 0, 1, 1], [], []>} : vector<16x128xbf16>, vector<128x128xbf16>, vector<16x128xf32> -> vector<16x128xf32>
    %c0_17 = arith.constant 0 : index
    %c0_18 = arith.constant 0 : index
    %25 = vector.load %arg7[%c0_17, %c0_18] : memref<1x128xf32, #tpu.memory_space<vmem>>, vector<1x128xf32>
    %26 = vector.broadcast %25 : vector<1x128xf32> to vector<16x128xf32>
    %27 = arith.addf %24, %26 : vector<16x128xf32>
    %cst_19 = arith.constant 0.000000e+00 : f32
    %28 = vector.broadcast %cst_19 : f32 to vector<16x128xf32>
    %29 = arith.subf %28, %27 : vector<16x128xf32>
    %30 = math.exp %29 : vector<16x128xf32>
    %cst_20 = arith.constant 1.000000e+00 : f32
    %31 = vector.broadcast %cst_20 : f32 to vector<16x128xf32>
    %32 = arith.addf %31, %30 : vector<16x128xf32>
    %cst_21 = arith.constant 1.000000e+00 : f32
    %33 = vector.broadcast %cst_21 : f32 to vector<16x128xf32>
    %34 = arith.divf %33, %32 : vector<16x128xf32>
    %c0_22 = arith.constant 0 : index
    %c0_23 = arith.constant 0 : index
    %35 = vector.load %arg8[%c0_22, %c0_23] : memref<16x128xf32, #tpu.memory_space<vmem>>, vector<16x128xf32>
    tpu.vector_store %arg8[%c0_22, %c0_23], %34 {strides = array<i32>} : memref<16x128xf32, #tpu.memory_space<vmem>>, vector<16x128xf32>,
    return
  }
  func.func @transform_0(%arg0: i32) -> (i32, i32) {
    %c0_i32 = arith.constant 0 : i32
    %c0_i32_0 = arith.constant 0 : i32
    return %arg0, %c0_i32 : i32, i32
  }
  func.func @transform_1(%arg0: i32) -> (i32, i32) {
    %c0_i32 = arith.constant 0 : i32
    %c0_i32_0 = arith.constant 0 : i32
    %c0_i32_1 = arith.constant 0 : i32
    return %c0_i32, %c0_i32_0 : i32, i32
  }
  func.func @transform_2(%arg0: i32) -> (i32, i32) {
    %c0_i32 = arith.constant 0 : i32
    %c0_i32_0 = arith.constant 0 : i32
    %c0_i32_1 = arith.constant 0 : i32
    return %c0_i32, %c0_i32_0 : i32, i32
  }
  func.func @transform_3(%arg0: i32) -> (i32, i32) {
    %c0_i32 = arith.constant 0 : i32
    %c0_i32_0 = arith.constant 0 : i32
    %c0_i32_1 = arith.constant 0 : i32
    return %c0_i32, %c0_i32_0 : i32, i32
  }
  func.func @transform_4(%arg0: i32) -> (i32, i32) {
    %c0_i32 = arith.constant 0 : i32
    %c0_i32_0 = arith.constant 0 : i32
    %c0_i32_1 = arith.constant 0 : i32
    return %c0_i32, %c0_i32_0 : i32, i32
  }
  func.func @transform_5(%arg0: i32) -> (i32, i32) {
    %c0_i32 = arith.constant 0 : i32
    %c0_i32_0 = arith.constant 0 : i32
    %c0_i32_1 = arith.constant 0 : i32
    return %c0_i32, %c0_i32_0 : i32, i32
  }
  func.func @transform_6(%arg0: i32) -> (i32, i32) {
    %c0_i32 = arith.constant 0 : i32
    %c0_i32_0 = arith.constant 0 : i32
    %c0_i32_1 = arith.constant 0 : i32
    return %c0_i32, %c0_i32_0 : i32, i32
  }
  func.func @transform_7(%arg0: i32) -> (i32, i32) {
    %c0_i32 = arith.constant 0 : i32
    %c0_i32_0 = arith.constant 0 : i32
    return %arg0, %c0_i32 : i32, i32
  }
}

</mosaic_0001>

<llo_original>
// kernel: tpu_custom_call.1
$region0: #{tpu_custom_call.1}
  #allocation0 [shape = 'u32[]', space=smem, size = 0x4, offset = 0x4, fixed_abs, tag = 'smem constant byte address 0x4 - core index']
  #allocation1 [shape = 'u32[144,128]{1,0:T(1,128)}', space=vmem, size = 0x12000, scoped, tag = 'internal scratch']
  %s0 = inlined_call_operand.hbm [shape: bf16[64,128], index: 0, kind: input, shape index: {}]
  %s1 = inlined_call_operand.hbm [shape: bf16[128,128], index: 1, kind: input, shape index: {}]
  %s2 = inlined_call_operand.vmem [shape: f32[1,128], index: 2, kind: input, shape index: {}]
  %s3 = inlined_call_operand.hbm [shape: bf16[128,128], index: 3, kind: input, shape index: {}]
  %s4 = inlined_call_operand.vmem [shape: f32[1,128], index: 4, kind: input, shape index: {}]
  %s5 = inlined_call_operand.hbm [shape: bf16[128,128], index: 5, kind: input, shape index: {}]
  %s6 = inlined_call_operand.vmem [shape: f32[1,128], index: 6, kind: input, shape index: {}]
  %s7 = inlined_call_operand.hbm [shape: f32[64,128], index: 7, kind: output, shape index: {}]
  %s8 = sld [smem:[#allocation0]]
  $region77: #{tpu_custom_call.1} parent=0
    _
  %s10 = ssub.s32 1, %s8
  %s11 = scalar_select 0, %s10, %s8
  $region1: #{tpu_custom_call.1} parent=0
    #allocation2 [shape = 'u8[8192]{0}', space=vmem, size = 0x2000, scoped, tag = 'input window, operand 0']
    #allocation3 [shape = 's32[2]{0}', space=sflag, size = 0x8, scoped, tag = 'scoped memory for tpu_custom_call.1']
    #allocation4 [shape = 's32[2]{0}', space=sflag, size = 0x8, scoped, tag = 'scoped memory for tpu_custom_call.1']
    #allocation5 [shape = 'u8[32768]{0}', space=vmem, size = 0x8000, scoped, tag = 'input window, operand 1, single buffered']
    #allocation6 [shape = 's32[1]{0}', space=sflag, size = 0x4, scoped, tag = 'scoped memory for tpu_custom_call.1']
    #allocation7 [shape = 'u8[32768]{0}', space=vmem, size = 0x8000, scoped, tag = 'input window, operand 3, single buffered']
    #allocation8 [shape = 'u8[32768]{0}', space=vmem, size = 0x8000, scoped, tag = 'input window, operand 5, single buffered']
    #allocation9 [shape = 's32[1]{0}', space=sflag, size = 0x4, scoped, tag = 'scoped memory for tpu_custom_call.1']
    #allocation10 [shape = 'u8[16384]{0}', space=vmem, size = 0x4000, scoped, tag = 'output window, operand 0']
    %12 = vsyncpa [#allocation3], 0
    %s13 = scalar_lea.sflag [#allocation3], 1
    %14 = vsyncpa %s13, 0
    %15 = vsyncpa [#allocation6], 0
    %16 = vsyncpa [#allocation9], 0
    %17 = vsyncpa [#allocation4], 0
    %s18 = scalar_lea.sflag [#allocation4], 1
    %19 = vsyncpa %s18, 0
    loop: start=0, step=1, limit=6
    $region2: #{tpu_custom_call.1} parent=1 // loop_pre_header
      _
    $region3: #{tpu_custom_call.1} parent=1 // loop_header
      %s21 = sphi 0, %s25
      %p22 = scmp.ge.s32.totalorder %s21, 6
      %s31 = sphi 0, %s33
      %s34 = sphi 0, %s31
      %s35 = sphi 0, %s34
      %s51 = sphi 0, %s35
      %s55 = sphi 0, %s55
      %s57 = sphi 0, %s55
      %s58 = sphi 0, %s57
      %s72 = sphi 0, %s58
      %s76 = sphi 0, %s76
      %s78 = sphi 0, %s76
      %s79 = sphi 0, %s78
      %s93 = sphi 0, %s79
      %s97 = sphi 0, %s97
      %s99 = sphi 0, %s97
      %s100 = sphi 0, %s99
      %s114 = sphi 0, %s100
      %s118 = sphi 0, %s118
      %s120 = sphi 0, %s118
      %s121 = sphi 0, %s120
      %s135 = sphi 0, %s121
      %s139 = sphi 0, %s139
      %s141 = sphi 0, %s139
      %s142 = sphi 0, %s141
      %s156 = sphi 0, %s142
      %s160 = sphi 0, %s160
      %s162 = sphi 0, %s160
      %s163 = sphi 0, %s162
      %s177 = sphi 0, %s163
      %s183 = sphi 0, %s185
      %s186 = sphi 0, %s183
      %s187 = sphi 0, %s186
      %s203 = sphi 0, %s187
    $region4: #{tpu_custom_call.1} parent=1 // loop_header_branch
      %24 = sbr.rel (%p22) target = $region8
    $region5: #{tpu_custom_call.1} parent=1 // loop_body
      %s26 = ssub.s32 %s21, 1
      %s27 = ssub.s32 %s21, 2
      %s28 = sadd.s32 %s21, 1
      %s29 = ssub.s32 %s21, %s28
      %p30 = scmp.eq.s32.totalorder %s29, 0
      %s32 = sadd.s32 %s31, 1
      %s33 = scalar_select %p30, %s31, %s32
      %p36 = pneg %p30
      %p37 = scmp.eq.s32.totalorder %s21, 3
      %p38 = por %p36, %p37
      %p39 = scmp.ne.s32.totalorder %s31, %s34
      %p40 = scmp.eq.s32.totalorder %s21, 0
      %p41 = por %p39, %p40
      %p42 = scmp.ne.s32.totalorder %s31, %s34
      %p43 = scmp.eq.s32.totalorder %s26, 3
      %p44 = por %p42, %p43
      %p45 = scmp.ne.s32.totalorder %s34, %s35
      %p46 = scmp.eq.s32.totalorder %s26, 0
      %p47 = por %p45, %p46
      %p48 = scmp.ne.s32.totalorder %s34, %s35
      %p49 = scmp.eq.s32.totalorder %s27, 3
      %p50 = por %p48, %p49
      %p52 = scmp.ne.s32.totalorder %s35, %s51
      %p53 = scmp.eq.s32.totalorder %s27, 0
      %p54 = por %p52, %p53
      %s56 = sadd.s32 %s55, 1
      %p59 = scmp.eq.s32.totalorder %s21, 3
      %p60 = scmp.ne.s32.totalorder %s55, %s57
      %p61 = scmp.eq.s32.totalorder %s21, 0
      %p62 = por %p60, %p61
      %p63 = scmp.ne.s32.totalorder %s55, %s57
      %p64 = scmp.eq.s32.totalorder %s26, 3
      %p65 = por %p63, %p64
      %p66 = scmp.ne.s32.totalorder %s57, %s58
      %p67 = scmp.eq.s32.totalorder %s26, 0
      %p68 = por %p66, %p67
      %p69 = scmp.ne.s32.totalorder %s57, %s58
      %p70 = scmp.eq.s32.totalorder %s27, 3
      %p71 = por %p69, %p70
      %p73 = scmp.ne.s32.totalorder %s58, %s72
      %p74 = scmp.eq.s32.totalorder %s27, 0
      %p75 = por %p73, %p74
      %s77 = sadd.s32 %s76, 1
      %p80 = scmp.eq.s32.totalorder %s21, 3
      %p81 = scmp.ne.s32.totalorder %s76, %s78
      %p82 = scmp.eq.s32.totalorder %s21, 0
      %p83 = por %p81, %p82
      %p84 = scmp.ne.s32.totalorder %s76, %s78
      %p85 = scmp.eq.s32.totalorder %s26, 3
      %p86 = por %p84, %p85
      %p87 = scmp.ne.s32.totalorder %s78, %s79
      %p88 = scmp.eq.s32.totalorder %s26, 0
      %p89 = por %p87, %p88
      %p90 = scmp.ne.s32.totalorder %s78, %s79
      %p91 = scmp.eq.s32.totalorder %s27, 3
      %p92 = por %p90, %p91
      %p94 = scmp.ne.s32.totalorder %s79, %s93
      %p95 = scmp.eq.s32.totalorder %s27, 0
      %p96 = por %p94, %p95
      %s98 = sadd.s32 %s97, 1
      %p101 = scmp.eq.s32.totalorder %s21, 3
      %p102 = scmp.ne.s32.totalorder %s97, %s99
      %p103 = scmp.eq.s32.totalorder %s21, 0
      %p104 = por %p102, %p103
      %p105 = scmp.ne.s32.totalorder %s97, %s99
      %p106 = scmp.eq.s32.totalorder %s26, 3
      %p107 = por %p105, %p106
      %p108 = scmp.ne.s32.totalorder %s99, %s100
      %p109 = scmp.eq.s32.totalorder %s26, 0
      %p110 = por %p108, %p109
      %p111 = scmp.ne.s32.totalorder %s99, %s100
      %p112 = scmp.eq.s32.totalorder %s27, 3
      %p113 = por %p111, %p112
      %p115 = scmp.ne.s32.totalorder %s100, %s114
      %p116 = scmp.eq.s32.totalorder %s27, 0
      %p117 = por %p115, %p116
      %s119 = sadd.s32 %s118, 1
      %p122 = scmp.eq.s32.totalorder %s21, 3
      %p123 = scmp.ne.s32.totalorder %s118, %s120
      %p124 = scmp.eq.s32.totalorder %s21, 0
      %p125 = por %p123, %p124
      %p126 = scmp.ne.s32.totalorder %s118, %s120
      %p127 = scmp.eq.s32.totalorder %s26, 3
      %p128 = por %p126, %p127
      %p129 = scmp.ne.s32.totalorder %s120, %s121
      %p130 = scmp.eq.s32.totalorder %s26, 0
      %p131 = por %p129, %p130
      %p132 = scmp.ne.s32.totalorder %s120, %s121
      %p133 = scmp.eq.s32.totalorder %s27, 3
      %p134 = por %p132, %p133
      %p136 = scmp.ne.s32.totalorder %s121, %s135
      %p137 = scmp.eq.s32.totalorder %s27, 0
      %p138 = por %p136, %p137
      %s140 = sadd.s32 %s139, 1
      %p143 = scmp.eq.s32.totalorder %s21, 3
      %p144 = scmp.ne.s32.totalorder %s139, %s141
      %p145 = scmp.eq.s32.totalorder %s21, 0
      %p146 = por %p144, %p145
      %p147 = scmp.ne.s32.totalorder %s139, %s141
      %p148 = scmp.eq.s32.totalorder %s26, 3
      %p149 = por %p147, %p148
      %p150 = scmp.ne.s32.totalorder %s141, %s142
      %p151 = scmp.eq.s32.totalorder %s26, 0
      %p152 = por %p150, %p151
      %p153 = scmp.ne.s32.totalorder %s141, %s142
      %p154 = scmp.eq.s32.totalorder %s27, 3
      %p155 = por %p153, %p154
      %p157 = scmp.ne.s32.totalorder %s142, %s156
      %p158 = scmp.eq.s32.totalorder %s27, 0
      %p159 = por %p157, %p158
      %s161 = sadd.s32 %s160, 1
      %p164 = scmp.eq.s32.totalorder %s21, 3
      %p165 = scmp.ne.s32.totalorder %s160, %s162
      %p166 = scmp.eq.s32.totalorder %s21, 0
      %p167 = por %p165, %p166
      %p168 = scmp.ne.s32.totalorder %s160, %s162
      %p169 = scmp.eq.s32.totalorder %s26, 3
      %p170 = por %p168, %p169
      %p171 = scmp.ne.s32.totalorder %s162, %s163
      %p172 = scmp.eq.s32.totalorder %s26, 0
      %p173 = por %p171, %p172
      %p174 = scmp.ne.s32.totalorder %s162, %s163
      %p175 = scmp.eq.s32.totalorder %s27, 3
      %p176 = por %p174, %p175
      %p178 = scmp.ne.s32.totalorder %s163, %s177
      %p179 = scmp.eq.s32.totalorder %s27, 0
      %p180 = por %p178, %p179
      %s181 = ssub.s32 %s21, %s28
      %p182 = scmp.eq.s32.totalorder %s181, 0
      %s184 = sadd.s32 %s183, 1
      %s185 = scalar_select %p182, %s183, %s184
      %p188 = pneg %p182
      %p189 = scmp.eq.s32.totalorder %s21, 3
      %p190 = por %p188, %p189
      %p191 = scmp.ne.s32.totalorder %s183, %s186
      %p192 = scmp.eq.s32.totalorder %s21, 0
      %p193 = por %p191, %p192
      %p194 = scmp.ne.s32.totalorder %s183, %s186
      %p195 = scmp.eq.s32.totalorder %s26, 3
      %p196 = por %p194, %p195
      %p197 = scmp.ne.s32.totalorder %s186, %s187
      %p198 = scmp.eq.s32.totalorder %s26, 0
      %p199 = por %p197, %p198
      %p200 = scmp.ne.s32.totalorder %s186, %s187
      %p201 = scmp.eq.s32.totalorder %s27, 3
      %p202 = por %p200, %p201
      %p204 = scmp.ne.s32.totalorder %s187, %s203
      %p205 = scmp.eq.s32.totalorder %s27, 0
      %p206 = por %p204, %p205
      %p207 = scmp.le.s32.totalorder 1, %s21
      %p208 = scmp.lt.s32.totalorder %s21, 5
      %p209 = pnand %p207, %p208
      %p210 = pneg %p209
      // Predicated region
      $region9: #{tpu_custom_call.1} parent=5 // pred_check
        _
      $region10: #{tpu_custom_call.1} parent=5 // pred_check_branch
        %212 = sbr.rel (%p209) target = $region12
      $region11: #{tpu_custom_call.1} parent=5 // pred_region
        %s213 = ssub.s32 %s21, 1
        // Predicated region
        $region13: #{tpu_custom_call.1} parent=11 // pred_check
          %p214 = pneg %p68
        $region14: #{tpu_custom_call.1} parent=11 // pred_check_branch
          %216 = sbr.rel (%p214) target = $region16
        $region15: #{tpu_custom_call.1} parent=11 // pred_region
          %s218 = ssub.s32 1024, 1024
          %219 = vsyncadd [#allocation6], %s218
          %s220 = sshll.u32 [#allocation5], 4
          %s221 = int_to_ptr.vmem [resolvable:$true] %s220
          %226 = dma.hbm_to_vmem [thread:$0]  %s1, 1024, %s221, [#allocation6], 64, 64, 4
        $region16: #{tpu_custom_call.1} parent=11 // pred_fallthru
          _
        // Predicated region
        $region17: #{tpu_custom_call.1} parent=11 // pred_check
          %p227 = pneg %p89
        $region18: #{tpu_custom_call.1} parent=11 // pred_check_branch
          %229 = sbr.rel (%p227) target = $region20
        $region19: #{tpu_custom_call.1} parent=11 // pred_region
          _
        $region20: #{tpu_custom_call.1} parent=11 // pred_fallthru
          _
        // Predicated region
        $region21: #{tpu_custom_call.1} parent=11 // pred_check
          %p230 = pneg %p110
        $region22: #{tpu_custom_call.1} parent=11 // pred_check_branch
          %232 = sbr.rel (%p230) target = $region24
        $region23: #{tpu_custom_call.1} parent=11 // pred_region
          %s234 = ssub.s32 1024, 1024
          %235 = vsyncadd [#allocation6], %s234
          %s236 = sshll.u32 [#allocation7], 4
          %s237 = int_to_ptr.vmem [resolvable:$true] %s236
          %242 = dma.hbm_to_vmem [thread:$0]  %s3, 1024, %s237, [#allocation6], 64, 64, 4
        $region24: #{tpu_custom_call.1} parent=11 // pred_fallthru
          _
        // Predicated region
        $region25: #{tpu_custom_call.1} parent=11 // pred_check
          %p243 = pneg %p131
        $region26: #{tpu_custom_call.1} parent=11 // pred_check_branch
          %245 = sbr.rel (%p243) target = $region28
        $region27: #{tpu_custom_call.1} parent=11 // pred_region
          _
        $region28: #{tpu_custom_call.1} parent=11 // pred_fallthru
          _
        // Predicated region
        $region29: #{tpu_custom_call.1} parent=11 // pred_check
          %p246 = pneg %p152
        $region30: #{tpu_custom_call.1} parent=11 // pred_check_branch
          %248 = sbr.rel (%p246) target = $region32
        $region31: #{tpu_custom_call.1} parent=11 // pred_region
          %s250 = ssub.s32 1024, 1024
          %251 = vsyncadd [#allocation9], %s250
          %s252 = sshll.u32 [#allocation8], 4
          %s253 = int_to_ptr.vmem [resolvable:$true] %s252
          %258 = dma.hbm_to_vmem [thread:$0]  %s5, 1024, %s253, [#allocation9], 64, 64, 4
        $region32: #{tpu_custom_call.1} parent=11 // pred_fallthru
          _
        // Predicated region
        $region33: #{tpu_custom_call.1} parent=11 // pred_check
          %p259 = pneg %p173
        $region34: #{tpu_custom_call.1} parent=11 // pred_check_branch
          %261 = sbr.rel (%p259) target = $region36
        $region35: #{tpu_custom_call.1} parent=11 // pred_region
          _
        $region36: #{tpu_custom_call.1} parent=11 // pred_fallthru
          _
      $region12: #{tpu_custom_call.1} parent=5 // pred_fallthru
        _
      %p262 = scmp.lt.s32.totalorder %s21, 4
      // Predicated region
      $region37: #{tpu_custom_call.1} parent=5 // pred_check
        %p263 = pneg %p262
      $region38: #{tpu_custom_call.1} parent=5 // pred_check_branch
        %265 = sbr.rel (%p263) target = $region40
      $region39: #{tpu_custom_call.1} parent=5 // pred_region
        // Predicated region
        $region41: #{tpu_custom_call.1} parent=39 // pred_check
          %p266 = pneg %p41
        $region42: #{tpu_custom_call.1} parent=39 // pred_check_branch
          %268 = sbr.rel (%p266) target = $region44
        $region43: #{tpu_custom_call.1} parent=39 // pred_region
          %s269 = sand.u32 %s31, 1
          %s270 = scalar_lea.sflag [#allocation3], %s269
          %s271 = sand.u32 %s31, 1
          %s272 = smul.addr %s271, 8
          %s273 = scalar_lea.vmem [#allocation2], %s272
          %s274 = smul.u32 2, %s21
          %s276 = ssub.s32 128, 128
          %277 = vsyncadd %s270, %s276
          %s278 = smul.addr %s274, 64
          %s279 = scalar_lea.hbm %s0, %s278
          %s280 = sshll.u32 %s273, 4
          %s281 = int_to_ptr.vmem [resolvable:$true] %s280
          %286 = dma.hbm_to_vmem [thread:$0]  %s279, 128, %s281, %s270, 64, 64, 4
        $region44: #{tpu_custom_call.1} parent=39 // pred_fallthru
          _
      $region40: #{tpu_custom_call.1} parent=5 // pred_fallthru
        _
      %p287 = scmp.le.s32.totalorder 1, %s21
      %p288 = scmp.lt.s32.totalorder %s21, 5
      %p289 = pnand %p287, %p288
      %p290 = pneg %p289
      // Predicated region
      $region45: #{tpu_custom_call.1} parent=5 // pred_check
        _
      $region46: #{tpu_custom_call.1} parent=5 // pred_check_branch
        %292 = sbr.rel (%p289) target = $region48
      $region47: #{tpu_custom_call.1} parent=5 // pred_region
        %s293 = ssub.s32 %s21, 1
        %s294 = sand.u32 %s34, 1
        %s295 = scalar_lea.sflag [#allocation3], %s294
        %s296 = sand.u32 %s34, 1
        %s297 = smul.addr %s296, 8
        %s298 = scalar_lea.vmem [#allocation2], %s297
        // Predicated region
        $region49: #{tpu_custom_call.1} parent=47 // pred_check
          %p299 = pneg %p47
        $region50: #{tpu_custom_call.1} parent=47 // pred_check_branch
          %301 = sbr.rel (%p299) target = $region52
        $region51: #{tpu_custom_call.1} parent=47 // pred_region
          %302 = dma.done %s295, 128
        $region52: #{tpu_custom_call.1} parent=47 // pred_fallthru
          _
        // Predicated region
        $region53: #{tpu_custom_call.1} parent=47 // pred_check
          %p303 = pneg %p68
        $region54: #{tpu_custom_call.1} parent=47 // pred_check_branch
          %305 = sbr.rel (%p303) target = $region56
        $region55: #{tpu_custom_call.1} parent=47 // pred_region
          %306 = dma.done [#allocation6], 1024
        $region56: #{tpu_custom_call.1} parent=47 // pred_fallthru
          _
        // Predicated region
        $region57: #{tpu_custom_call.1} parent=47 // pred_check
          %p307 = pneg %p110
        $region58: #{tpu_custom_call.1} parent=47 // pred_check_branch
          %309 = sbr.rel (%p307) target = $region60
        $region59: #{tpu_custom_call.1} parent=47 // pred_region
          %310 = dma.done [#allocation6], 1024
        $region60: #{tpu_custom_call.1} parent=47 // pred_fallthru
          _
        // Predicated region
        $region61: #{tpu_custom_call.1} parent=47 // pred_check
          %p311 = pneg %p152
        $region62: #{tpu_custom_call.1} parent=47 // pred_check_branch
          %313 = sbr.rel (%p311) target = $region64
        $region63: #{tpu_custom_call.1} parent=47 // pred_region
          %314 = dma.done [#allocation9], 1024
        $region64: #{tpu_custom_call.1} parent=47 // pred_fallthru
          _
        %s315 = sand.u32 %s34, 1
        %s316 = scalar_lea.sflag [#allocation3], %s315
        %s317 = sand.u32 %s34, 1
        %s318 = smul.addr %s317, 8
        %s319 = scalar_lea.vmem [#allocation2], %s318
        %p320 = pneg %p47
        %p321 = pneg %p44
        %p322 = pneg %p68
        %p323 = pneg %p65
        %p324 = pneg %p89
        %p325 = pneg %p86
        %p326 = pneg %p110
        %p327 = pneg %p107
        %p328 = pneg %p131
        %p329 = pneg %p128
        %p330 = pneg %p152
        %p331 = pneg %p149
        %p332 = pneg %p173
        %p333 = pneg %p170
        %p334 = pneg %p199
        %p335 = pneg %p196
        %s336 = sand.u32 %s186, 1
        %s337 = scalar_lea.sflag [#allocation4], %s336
        %s338 = sand.u32 %s186, 1
        %s339 = smul.addr %s338, 16
        %s340 = scalar_lea.vmem [#allocation10], %s339
        %s341 = smul.u32 2, %s26
        %s342 = smul.u32 2, %s26
        %v344 = vld [vmem:[%s298] sm:$0xf]
        %v345 = vld [vmem:[%s298 + $0x4] sm:$0xf]
        %v346 = vld [vmem:[#allocation5] sm:$0xf]
        %v347 = vld [vmem:[#allocation5 + $0x4] sm:$0xf]
        %v348 = vld [vmem:[#allocation5 + $0x8] sm:$0xf]
        %v349 = vld [vmem:[#allocation5 + $0xc] sm:$0xf]
        %v350 = vld [vmem:[#allocation5 + $0x10] sm:$0xf]
        %v351 = vld [vmem:[#allocation5 + $0x14] sm:$0xf]
        %v352 = vld [vmem:[#allocation5 + $0x18] sm:$0xf]
        %v353 = vld [vmem:[#allocation5 + $0x1c] sm:$0xf]
        %v354 = vld [vmem:[#allocation5 + $0x20] sm:$0xf]
        %v355 = vld [vmem:[#allocation5 + $0x24] sm:$0xf]
        %v356 = vld [vmem:[#allocation5 + $0x28] sm:$0xf]
        %v357 = vld [vmem:[#allocation5 + $0x2c] sm:$0xf]
        %v358 = vld [vmem:[#allocation5 + $0x30] sm:$0xf]
        %v359 = vld [vmem:[#allocation5 + $0x34] sm:$0xf]
        %v360 = vld [vmem:[#allocation5 + $0x38] sm:$0xf]
        %v361 = vld [vmem:[#allocation5 + $0x3c] sm:$0xf]
        %v362 = vld [vmem:[%s2] sm:$0x1]
        %v364 = vlaneseq
        %v365 = vshrl.u32 %v364, 7
        %v366 = vsub.s32 0, %v365
        %v367 = vrot.slane %v362, %v366
        %v371 = vunpack.c.l.b16 %v344
        %v372 = vunpack.c.l.b16 %v345
        %v373 = vpack.c.b16 %v372, %v371
        %v391 = vunpack.c.l.b16 %v346
        %v392 = vunpack.c.l.b16 %v347
        %v393 = vunpack.c.l.b16 %v348
        %v394 = vunpack.c.l.b16 %v349
        %v395 = vunpack.c.l.b16 %v350
        %v396 = vunpack.c.l.b16 %v351
        %v397 = vunpack.c.l.b16 %v352
        %v398 = vunpack.c.l.b16 %v353
        %v399 = vunpack.c.l.b16 %v354
        %v400 = vunpack.c.l.b16 %v355
        %v401 = vunpack.c.l.b16 %v356
        %v402 = vunpack.c.l.b16 %v357
        %v403 = vunpack.c.l.b16 %v358
        %v404 = vunpack.c.l.b16 %v359
        %v405 = vunpack.c.l.b16 %v360
        %v406 = vunpack.c.l.b16 %v361
        %v407 = vpack.c.b16 %v392, %v391
        %v408 = vpack.c.b16 %v394, %v393
        %v409 = vpack.c.b16 %v396, %v395
        %v410 = vpack.c.b16 %v398, %v397
        %v411 = vpack.c.b16 %v400, %v399
        %v412 = vpack.c.b16 %v402, %v401
        %v413 = vpack.c.b16 %v404, %v403
        %v414 = vpack.c.b16 %v406, %v405
        %423 = vmatprep.subr.bf16.mxu0 0
        %424 = vmatpush1.bf16.msra.mxu0 %v414
        %425 = vmatprep.subr.bf16.mxu0 0
        %426 = vmatpush1.bf16.msra.mxu0 %v413
        %427 = vmatprep.subr.bf16.mxu0 0
        %428 = vmatpush1.bf16.msra.mxu0 %v412
        %429 = vmatprep.subr.bf16.mxu0 0
        %430 = vmatpush1.bf16.msra.mxu0 %v411
        %431 = vmatprep.subr.bf16.mxu0 0
        %432 = vmatpush1.bf16.msra.mxu0 %v410
        %433 = vmatprep.subr.bf16.mxu0 0
        %434 = vmatpush1.bf16.msra.mxu0 %v409
        %435 = vmatprep.subr.bf16.mxu0 0
        %436 = vmatpush1.bf16.msra.mxu0 %v408
        %437 = vmatprep.subr.bf16.mxu0 0
        %438 = vmatpush1.bf16.msra.mxu0 %v407
        %439 = vmatprep.subr.bf16.mxu0 0
        %440 = vmatpush2.bf16.msra.mxu0 0
        %441 = vmatprep.subr.bf16.mxu0 0
        %442 = vmatpush2.bf16.msra.mxu0 0
        %443 = vmatprep.subr.bf16.mxu0 0
        %444 = vmatpush2.bf16.msra.mxu0 0
        %445 = vmatprep.subr.bf16.mxu0 0
        %446 = vmatpush2.bf16.msra.mxu0 0
        %447 = vmatprep.subr.bf16.mxu0 0
        %448 = vmatpush2.bf16.msra.mxu0 0
        %449 = vmatprep.subr.bf16.mxu0 0
        %450 = vmatpush2.bf16.msra.mxu0 0
        %451 = vmatprep.subr.bf16.mxu0 0
        %452 = vmatpush2.bf16.msra.mxu0 0
        %453 = vmatprep.subr.bf16.mxu0 0
        %454 = vmatpush2.bf16.msra.mxu0 0
        %455 = vmatprep.mubr.bf16.mxu0 0
        %456 = vmatmul.mubr.bf16.gmra.mxu0 %v373
        %v457 = vpop.f32.mrf.mxu0
        %v458 = vadd.f32 %v367, %v457
        %v459 = vpop.f32.mrf.mxu0
        %v460 = vpop.f32.mrf.mxu0
        %v461 = vadd.f32 %v367, %v460
        %v462 = vpop.f32.mrf.mxu0
        %463 = vdwg.mxu0
        %vm464 = vcmp.ge.f32.partialorder %v458, 0.0
        %vm465 = vcmp.ge.f32.partialorder %v461, 0.0
        %v466 = vmul.f32 %v458, 0.2
        %v467 = vmul.f32 %v461, 0.2
        %v468 = vsel %vm464, %v458, %v466
        %v469 = vsel %vm465, %v461, %v467
        %v470 = vpack.c.bf16 %v469, %v468
        %v471 = vld [vmem:[#allocation7] sm:$0xf]
        %v472 = vld [vmem:[#allocation7 + $0x4] sm:$0xf]
        %v473 = vld [vmem:[#allocation7 + $0x8] sm:$0xf]
        %v474 = vld [vmem:[#allocation7 + $0xc] sm:$0xf]
        %v475 = vld [vmem:[#allocation7 + $0x10] sm:$0xf]
        %v476 = vld [vmem:[#allocation7 + $0x14] sm:$0xf]
        %v477 = vld [vmem:[#allocation7 + $0x18] sm:$0xf]
        %v478 = vld [vmem:[#allocation7 + $0x1c] sm:$0xf]
        %v479 = vld [vmem:[#allocation7 + $0x20] sm:$0xf]
        %v480 = vld [vmem:[#allocation7 + $0x24] sm:$0xf]
        %v481 = vld [vmem:[#allocation7 + $0x28] sm:$0xf]
        %v482 = vld [vmem:[#allocation7 + $0x2c] sm:$0xf]
        %v483 = vld [vmem:[#allocation7 + $0x30] sm:$0xf]
        %v484 = vld [vmem:[#allocation7 + $0x34] sm:$0xf]
        %v485 = vld [vmem:[#allocation7 + $0x38] sm:$0xf]
        %v486 = vld [vmem:[#allocation7 + $0x3c] sm:$0xf]
        %v487 = vld [vmem:[%s4] sm:$0x1]
        %v489 = vlaneseq
        %v490 = vshrl.u32 %v489, 7
        %v491 = vsub.s32 0, %v490
        %v492 = vrot.slane %v487, %v491
        %v510 = vunpack.c.l.b16 %v471
        %v511 = vunpack.c.l.b16 %v472
        %v512 = vunpack.c.l.b16 %v473
        %v513 = vunpack.c.l.b16 %v474
        %v514 = vunpack.c.l.b16 %v475
        %v515 = vunpack.c.l.b16 %v476
        %v516 = vunpack.c.l.b16 %v477
        %v517 = vunpack.c.l.b16 %v478
        %v518 = vunpack.c.l.b16 %v479
        %v519 = vunpack.c.l.b16 %v480
        %v520 = vunpack.c.l.b16 %v481
        %v521 = vunpack.c.l.b16 %v482
        %v522 = vunpack.c.l.b16 %v483
        %v523 = vunpack.c.l.b16 %v484
        %v524 = vunpack.c.l.b16 %v485
        %v525 = vunpack.c.l.b16 %v486
        %v526 = vpack.c.b16 %v511, %v510
        %v527 = vpack.c.b16 %v513, %v512
        %v528 = vpack.c.b16 %v515, %v514
        %v529 = vpack.c.b16 %v517, %v516
        %v530 = vpack.c.b16 %v519, %v518
        %v531 = vpack.c.b16 %v521, %v520
        %v532 = vpack.c.b16 %v523, %v522
        %v533 = vpack.c.b16 %v525, %v524
        %542 = vmatprep.subr.bf16.mxu0 0
        %543 = vmatpush1.bf16.msra.mxu0 %v533
        %544 = vmatprep.subr.bf16.mxu0 0
        %545 = vmatpush1.bf16.msra.mxu0 %v532
        %546 = vmatprep.subr.bf16.mxu0 0
        %547 = vmatpush1.bf16.msra.mxu0 %v531
        %548 = vmatprep.subr.bf16.mxu0 0
        %549 = vmatpush1.bf16.msra.mxu0 %v530
        %550 = vmatprep.subr.bf16.mxu0 0
        %551 = vmatpush1.bf16.msra.mxu0 %v529
        %552 = vmatprep.subr.bf16.mxu0 0
        %553 = vmatpush1.bf16.msra.mxu0 %v528
        %554 = vmatprep.subr.bf16.mxu0 0
        %555 = vmatpush1.bf16.msra.mxu0 %v527
        %556 = vmatprep.subr.bf16.mxu0 0
        %557 = vmatpush1.bf16.msra.mxu0 %v526
        %558 = vmatprep.subr.bf16.mxu0 0
        %559 = vmatpush2.bf16.msra.mxu0 0
        %560 = vmatprep.subr.bf16.mxu0 0
        %561 = vmatpush2.bf16.msra.mxu0 0
        %562 = vmatprep.subr.bf16.mxu0 0
        %563 = vmatpush2.bf16.msra.mxu0 0
        %564 = vmatprep.subr.bf16.mxu0 0
        %565 = vmatpush2.bf16.msra.mxu0 0
        %566 = vmatprep.subr.bf16.mxu0 0
        %567 = vmatpush2.bf16.msra.mxu0 0
        %568 = vmatprep.subr.bf16.mxu0 0
        %569 = vmatpush2.bf16.msra.mxu0 0
        %570 = vmatprep.subr.bf16.mxu0 0
        %571 = vmatpush2.bf16.msra.mxu0 0
        %572 = vmatprep.subr.bf16.mxu0 0
        %573 = vmatpush2.bf16.msra.mxu0 0
        %574 = vmatprep.mubr.bf16.mxu0 0
        %575 = vmatmul.mubr.bf16.gmra.mxu0 %v470
        %v576 = vpop.f32.mrf.mxu0
        %v577 = vadd.f32 %v492, %v576
        %v578 = vpop.f32.mrf.mxu0
        %v579 = vpop.f32.mrf.mxu0
        %v580 = vadd.f32 %v492, %v579
        %v581 = vpop.f32.mrf.mxu0
        %582 = vdwg.mxu0
        %vm583 = vcmp.ge.f32.partialorder %v577, 0.0
        %vm584 = vcmp.ge.f32.partialorder %v580, 0.0
        %v585 = vmul.f32 %v577, 0.2
        %v586 = vmul.f32 %v580, 0.2
        %v587 = vsel %vm583, %v577, %v585
        %v588 = vsel %vm584, %v580, %v586
        %v589 = vpack.c.bf16 %v588, %v587
        %v590 = vld [vmem:[#allocation8] sm:$0xf]
        %v591 = vld [vmem:[#allocation8 + $0x4] sm:$0xf]
        %v592 = vld [vmem:[#allocation8 + $0x8] sm:$0xf]
        %v593 = vld [vmem:[#allocation8 + $0xc] sm:$0xf]
        %v594 = vld [vmem:[#allocation8 + $0x10] sm:$0xf]
        %v595 = vld [vmem:[#allocation8 + $0x14] sm:$0xf]
        %v596 = vld [vmem:[#allocation8 + $0x18] sm:$0xf]
        %v597 = vld [vmem:[#allocation8 + $0x1c] sm:$0xf]
        %v598 = vld [vmem:[#allocation8 + $0x20] sm:$0xf]
        %v599 = vld [vmem:[#allocation8 + $0x24] sm:$0xf]
        %v600 = vld [vmem:[#allocation8 + $0x28] sm:$0xf]
        %v601 = vld [vmem:[#allocation8 + $0x2c] sm:$0xf]
        %v602 = vld [vmem:[#allocation8 + $0x30] sm:$0xf]
        %v603 = vld [vmem:[#allocation8 + $0x34] sm:$0xf]
        %v604 = vld [vmem:[#allocation8 + $0x38] sm:$0xf]
        %v605 = vld [vmem:[#allocation8 + $0x3c] sm:$0xf]
        %v606 = vld [vmem:[%s6] sm:$0x1]
        %v608 = vlaneseq
        %v609 = vshrl.u32 %v608, 7
        %v610 = vsub.s32 0, %v609
        %v611 = vrot.slane %v606, %v610
        %v629 = vunpack.c.l.b16 %v590
        %v630 = vunpack.c.l.b16 %v591
        %v631 = vunpack.c.l.b16 %v592
        %v632 = vunpack.c.l.b16 %v593
        %v633 = vunpack.c.l.b16 %v594
        %v634 = vunpack.c.l.b16 %v595
        %v635 = vunpack.c.l.b16 %v596
        %v636 = vunpack.c.l.b16 %v597
        %v637 = vunpack.c.l.b16 %v598
        %v638 = vunpack.c.l.b16 %v599
        %v639 = vunpack.c.l.b16 %v600
        %v640 = vunpack.c.l.b16 %v601
        %v641 = vunpack.c.l.b16 %v602
        %v642 = vunpack.c.l.b16 %v603
        %v643 = vunpack.c.l.b16 %v604
        %v644 = vunpack.c.l.b16 %v605
        %v645 = vpack.c.b16 %v630, %v629
        %v646 = vpack.c.b16 %v632, %v631
        %v647 = vpack.c.b16 %v634, %v633
        %v648 = vpack.c.b16 %v636, %v635
        %v649 = vpack.c.b16 %v638, %v637
        %v650 = vpack.c.b16 %v640, %v639
        %v651 = vpack.c.b16 %v642, %v641
        %v652 = vpack.c.b16 %v644, %v643
        %661 = vmatprep.subr.bf16.mxu0 0
        %662 = vmatpush1.bf16.msra.mxu0 %v652
        %663 = vmatprep.subr.bf16.mxu0 0
        %664 = vmatpush1.bf16.msra.mxu0 %v651
        %665 = vmatprep.subr.bf16.mxu0 0
        %666 = vmatpush1.bf16.msra.mxu0 %v650
        %667 = vmatprep.subr.bf16.mxu0 0
        %668 = vmatpush1.bf16.msra.mxu0 %v649
        %669 = vmatprep.subr.bf16.mxu0 0
        %670 = vmatpush1.bf16.msra.mxu0 %v648
        %671 = vmatprep.subr.bf16.mxu0 0
        %672 = vmatpush1.bf16.msra.mxu0 %v647
        %673 = vmatprep.subr.bf16.mxu0 0
        %674 = vmatpush1.bf16.msra.mxu0 %v646
        %675 = vmatprep.subr.bf16.mxu0 0
        %676 = vmatpush1.bf16.msra.mxu0 %v645
        %677 = vmatprep.subr.bf16.mxu0 0
        %678 = vmatpush2.bf16.msra.mxu0 0
        %679 = vmatprep.subr.bf16.mxu0 0
        %680 = vmatpush2.bf16.msra.mxu0 0
        %681 = vmatprep.subr.bf16.mxu0 0
        %682 = vmatpush2.bf16.msra.mxu0 0
        %683 = vmatprep.subr.bf16.mxu0 0
        %684 = vmatpush2.bf16.msra.mxu0 0
        %685 = vmatprep.subr.bf16.mxu0 0
        %686 = vmatpush2.bf16.msra.mxu0 0
        %687 = vmatprep.subr.bf16.mxu0 0
        %688 = vmatpush2.bf16.msra.mxu0 0
        %689 = vmatprep.subr.bf16.mxu0 0
        %690 = vmatpush2.bf16.msra.mxu0 0
        %691 = vmatprep.subr.bf16.mxu0 0
        %692 = vmatpush2.bf16.msra.mxu0 0
        %693 = vmatprep.mubr.bf16.mxu0 0
        %694 = vmatmul.mubr.bf16.gmra.mxu0 %v589
        %v695 = vpop.f32.mrf.mxu0
        %v696 = vadd.f32 %v611, %v695
        %v697 = vpop.f32.mrf.mxu0
        %v698 = vpop.f32.mrf.mxu0
        %v699 = vadd.f32 %v611, %v698
        %v700 = vpop.f32.mrf.mxu0
        %701 = vdwg.mxu0
        %v702 = vsub.f32 0.0, %v696
        %v703 = vsub.f32 0.0, %v699
        %v704 = vmul.f32 %v702, 1.442695
        %v705 = vpow.pop %v704
        %v706 = vmul.f32 %v703, 1.442695
        %v707 = vpow.pop %v706
        %v708 = vadd.f32 %v705, 1.0
        %v709 = vadd.f32 %v707, 1.0
        %v710 = vrcp.pop %v708
        %v711 = vmul.f32 1.0, %v710
        %v712 = vrcp.pop %v709
        %v713 = vmul.f32 1.0, %v712
        %714 = vst [vmem:[%s340] sm:$0xff] %v711
        %715 = vst [vmem:[%s340 + $0x8] sm:$0xff] %v713
        %s716 = sand.u32 %s186, 1
        %s717 = scalar_lea.sflag [#allocation4], %s716
        %s718 = sand.u32 %s186, 1
        %s719 = smul.addr %s718, 16
        %s720 = scalar_lea.vmem [#allocation10], %s719
        // Predicated region
        $region65: #{tpu_custom_call.1} parent=47 // pred_check
          %p721 = pneg %p196
        $region66: #{tpu_custom_call.1} parent=47 // pred_check_branch
          %723 = sbr.rel (%p721) target = $region68
        $region67: #{tpu_custom_call.1} parent=47 // pred_region
          %s724 = smul.u32 2, %s26
          %s726 = ssub.s32 256, 256
          %727 = vsyncadd %s717, %s726
          %s728 = smul.addr %s724, 128
          %s729 = scalar_lea.hbm %s7, %s728
          %s730 = sshll.u32 %s720, 4
          %s731 = int_to_ptr.vmem [resolvable:$true] %s730
          %736 = dma.vmem_to_hbm [thread:$0]  %s731, 256, %s729, %s717, 128, 128, 8
        $region68: #{tpu_custom_call.1} parent=47 // pred_fallthru
          _
      $region48: #{tpu_custom_call.1} parent=5 // pred_fallthru
        _
      %p737 = scmp.le.s32.totalorder 2, %s21
      // Predicated region
      $region69: #{tpu_custom_call.1} parent=5 // pred_check
        %p738 = pneg %p737
      $region70: #{tpu_custom_call.1} parent=5 // pred_check_branch
        %740 = sbr.rel (%p738) target = $region72
      $region71: #{tpu_custom_call.1} parent=5 // pred_region
        %s741 = ssub.s32 %s21, 2
        // Predicated region
        $region73: #{tpu_custom_call.1} parent=71 // pred_check
          %p742 = pneg %p202
        $region74: #{tpu_custom_call.1} parent=71 // pred_check_branch
          %744 = sbr.rel (%p742) target = $region76
        $region75: #{tpu_custom_call.1} parent=71 // pred_region
          %s745 = sand.u32 %s187, 1
          %s746 = scalar_lea.sflag [#allocation4], %s745
          %s747 = sand.u32 %s187, 1
          %s748 = smul.addr %s747, 16
          %s749 = scalar_lea.vmem [#allocation10], %s748
          %750 = dma.done %s746, 256
        $region76: #{tpu_custom_call.1} parent=71 // pred_fallthru
          _
      $region72: #{tpu_custom_call.1} parent=5 // pred_fallthru
        _
    $region6: #{tpu_custom_call.1} parent=1 // loop_footer
      %s25 = sadd.s32 1, %s21
    $region7: #{tpu_custom_call.1} parent=1 // loop_footer_branch
      %20 = sbr.rel target = $region3
    $region8: #{tpu_custom_call.1} parent=1 // loop_exit
      _
    %751 = vsyncpa [#allocation3], 1
    %s752 = scalar_lea.sflag [#allocation3], 1
    %753 = vsyncpa %s752, 1
    %754 = vsyncpa [#allocation6], 1
    %755 = vsyncpa [#allocation9], 1
    %756 = vsyncpa [#allocation4], 1
    %s757 = scalar_lea.sflag [#allocation4], 1
    %758 = vsyncpa %s757, 1

// kernel: tpu_custom_call.1
$region0: #{tpu_custom_call.1}
  #allocation0 [shape = 'u32[]', space=smem, size = 0x4, offset = 0x4, fixed_abs, tag = 'smem constant byte address 0x4 - core index']
  #allocation1 [shape = 'u32[144,128]{1,0:T(1,128)}', space=vmem, size = 0x12000, scoped, tag = 'internal scratch']
  %s0 = inlined_call_operand.hbm [shape: bf16[64,128], index: 0, kind: input, shape index: {}]
  %s1 = inlined_call_operand.hbm [shape: bf16[128,128], index: 1, kind: input, shape index: {}]
  %s2 = inlined_call_operand.vmem [shape: f32[1,128], index: 2, kind: input, shape index: {}]
  %s3 = inlined_call_operand.hbm [shape: bf16[128,128], index: 3, kind: input, shape index: {}]
  %s4 = inlined_call_operand.vmem [shape: f32[1,128], index: 4, kind: input, shape index: {}]
  %s5 = inlined_call_operand.hbm [shape: bf16[128,128], index: 5, kind: input, shape index: {}]
  %s6 = inlined_call_operand.vmem [shape: f32[1,128], index: 6, kind: input, shape index: {}]
  %s7 = inlined_call_operand.hbm [shape: f32[64,128], index: 7, kind: output, shape index: {}]
  %s8 = sld [smem:[#allocation0]]
  $region77: #{tpu_custom_call.1} parent=0
    _
  %s10 = ssub.s32 1, %s8
  %s11 = scalar_select 0, %s10, %s8
  $region1: #{tpu_custom_call.1} parent=0
    #allocation2 [shape = 'u8[8192]{0}', space=vmem, size = 0x2000, scoped, tag = 'input window, operand 0']
    #allocation3 [shape = 's32[2]{0}', space=sflag, size = 0x8, scoped, tag = 'scoped memory for tpu_custom_call.1']
    #allocation4 [shape = 's32[2]{0}', space=sflag, size = 0x8, scoped, tag = 'scoped memory for tpu_custom_call.1']
    #allocation5 [shape = 'u8[32768]{0}', space=vmem, size = 0x8000, scoped, tag = 'input window, operand 1, single buffered']
    #allocation6 [shape = 's32[1]{0}', space=sflag, size = 0x4, scoped, tag = 'scoped memory for tpu_custom_call.1']
    #allocation7 [shape = 'u8[32768]{0}', space=vmem, size = 0x8000, scoped, tag = 'input window, operand 3, single buffered']
    #allocation8 [shape = 'u8[32768]{0}', space=vmem, size = 0x8000, scoped, tag = 'input window, operand 5, single buffered']
    #allocation9 [shape = 's32[1]{0}', space=sflag, size = 0x4, scoped, tag = 'scoped memory for tpu_custom_call.1']
    #allocation10 [shape = 'u8[16384]{0}', space=vmem, size = 0x4000, scoped, tag = 'output window, operand 0']
    %12 = vsyncpa [#allocation3], 0
    %s13 = scalar_lea.sflag [#allocation3], 1
    %14 = vsyncpa %s13, 0
    %15 = vsyncpa [#allocation6], 0
    %16 = vsyncpa [#allocation9], 0
    %17 = vsyncpa [#allocation4], 0
    %s18 = scalar_lea.sflag [#allocation4], 1
    %19 = vsyncpa %s18, 0
    loop: start=0, step=1, limit=6
    $region2: #{tpu_custom_call.1} parent=1 // loop_pre_header
      _
    $region3: #{tpu_custom_call.1} parent=1 // loop_header
      %s21 = sphi 0, %s25
      %p22 = scmp.ge.s32.totalorder %s21, 6
      %s31 = sphi 0, %s33
      %s34 = sphi 0, %s31
      %s35 = sphi 0, %s34
      %s51 = sphi 0, %s35
      %s55 = sphi 0, %s55
      %s57 = sphi 0, %s55
      %s58 = sphi 0, %s57
      %s72 = sphi 0, %s58
      %s76 = sphi 0, %s76
      %s78 = sphi 0, %s76
      %s79 = sphi 0, %s78
      %s93 = sphi 0, %s79
      %s97 = sphi 0, %s97
      %s99 = sphi 0, %s97
      %s100 = sphi 0, %s99
      %s114 = sphi 0, %s100
      %s118 = sphi 0, %s118
      %s120 = sphi 0, %s118
      %s121 = sphi 0, %s120
      %s135 = sphi 0, %s121
      %s139 = sphi 0, %s139
      %s141 = sphi 0, %s139
      %s142 = sphi 0, %s141
      %s156 = sphi 0, %s142
      %s160 = sphi 0, %s160
      %s162 = sphi 0, %s160
      %s163 = sphi 0, %s162
      %s177 = sphi 0, %s163
      %s183 = sphi 0, %s185
      %s186 = sphi 0, %s183
      %s187 = sphi 0, %s186
      %s203 = sphi 0, %s187
    $region4: #{tpu_custom_call.1} parent=1 // loop_header_branch
      %24 = sbr.rel (%p22) target = $region8
    $region5: #{tpu_custom_call.1} parent=1 // loop_body
      %s26 = ssub.s32 %s21, 1
      %s27 = ssub.s32 %s21, 2
      %s28 = sadd.s32 %s21, 1
      %s29 = ssub.s32 %s21, %s28
      %p30 = scmp.eq.s32.totalorder %s29, 0
      %s32 = sadd.s32 %s31, 1
      %s33 = scalar_select %p30, %s31, %s32
      %p36 = pneg %p30
      %p37 = scmp.eq.s32.totalorder %s21, 3
      %p38 = por %p36, %p37
      %p39 = scmp.ne.s32.totalorder %s31, %s34
      %p40 = scmp.eq.s32.totalorder %s21, 0
      %p41 = por %p39, %p40
      %p42 = scmp.ne.s32.totalorder %s31, %s34
      %p43 = scmp.eq.s32.totalorder %s26, 3
      %p44 = por %p42, %p43
      %p45 = scmp.ne.s32.totalorder %s34, %s35
      %p46 = scmp.eq.s32.totalorder %s26, 0
      %p47 = por %p45, %p46
      %p48 = scmp.ne.s32.totalorder %s34, %s35
      %p49 = scmp.eq.s32.totalorder %s27, 3
      %p50 = por %p48, %p49
      %p52 = scmp.ne.s32.totalorder %s35, %s51
      %p53 = scmp.eq.s32.totalorder %s27, 0
      %p54 = por %p52, %p53
      %s56 = sadd.s32 %s55, 1
      %p59 = scmp.eq.s32.totalorder %s21, 3
      %p60 = scmp.ne.s32.totalorder %s55, %s57
      %p61 = scmp.eq.s32.totalorder %s21, 0
      %p62 = por %p60, %p61
      %p63 = scmp.ne.s32.totalorder %s55, %s57
      %p64 = scmp.eq.s32.totalorder %s26, 3
      %p65 = por %p63, %p64
      %p66 = scmp.ne.s32.totalorder %s57, %s58
      %p67 = scmp.eq.s32.totalorder %s26, 0
      %p68 = por %p66, %p67
      %p69 = scmp.ne.s32.totalorder %s57, %s58
      %p70 = scmp.eq.s32.totalorder %s27, 3
      %p71 = por %p69, %p70
      %p73 = scmp.ne.s32.totalorder %s58, %s72
      %p74 = scmp.eq.s32.totalorder %s27, 0
      %p75 = por %p73, %p74
      %s77 = sadd.s32 %s76, 1
      %p80 = scmp.eq.s32.totalorder %s21, 3
      %p81 = scmp.ne.s32.totalorder %s76, %s78
      %p82 = scmp.eq.s32.totalorder %s21, 0
      %p83 = por %p81, %p82
      %p84 = scmp.ne.s32.totalorder %s76, %s78
      %p85 = scmp.eq.s32.totalorder %s26, 3
      %p86 = por %p84, %p85
      %p87 = scmp.ne.s32.totalorder %s78, %s79
      %p88 = scmp.eq.s32.totalorder %s26, 0
      %p89 = por %p87, %p88
      %p90 = scmp.ne.s32.totalorder %s78, %s79
      %p91 = scmp.eq.s32.totalorder %s27, 3
      %p92 = por %p90, %p91
      %p94 = scmp.ne.s32.totalorder %s79, %s93
      %p95 = scmp.eq.s32.totalorder %s27, 0
      %p96 = por %p94, %p95
      %s98 = sadd.s32 %s97, 1
      %p101 = scmp.eq.s32.totalorder %s21, 3
      %p102 = scmp.ne.s32.totalorder %s97, %s99
      %p103 = scmp.eq.s32.totalorder %s21, 0
      %p104 = por %p102, %p103
      %p105 = scmp.ne.s32.totalorder %s97, %s99
      %p106 = scmp.eq.s32.totalorder %s26, 3
      %p107 = por %p105, %p106
      %p108 = scmp.ne.s32.totalorder %s99, %s100
      %p109 = scmp.eq.s32.totalorder %s26, 0
      %p110 = por %p108, %p109
      %p111 = scmp.ne.s32.totalorder %s99, %s100
      %p112 = scmp.eq.s32.totalorder %s27, 3
      %p113 = por %p111, %p112
      %p115 = scmp.ne.s32.totalorder %s100, %s114
      %p116 = scmp.eq.s32.totalorder %s27, 0
      %p117 = por %p115, %p116
      %s119 = sadd.s32 %s118, 1
      %p122 = scmp.eq.s32.totalorder %s21, 3
      %p123 = scmp.ne.s32.totalorder %s118, %s120
      %p124 = scmp.eq.s32.totalorder %s21, 0
      %p125 = por %p123, %p124
      %p126 = scmp.ne.s32.totalorder %s118, %s120
      %p127 = scmp.eq.s32.totalorder %s26, 3
      %p128 = por %p126, %p127
      %p129 = scmp.ne.s32.totalorder %s120, %s121
      %p130 = scmp.eq.s32.totalorder %s26, 0
      %p131 = por %p129, %p130
      %p132 = scmp.ne.s32.totalorder %s120, %s121
      %p133 = scmp.eq.s32.totalorder %s27, 3
      %p134 = por %p132, %p133
      %p136 = scmp.ne.s32.totalorder %s121, %s135
      %p137 = scmp.eq.s32.totalorder %s27, 0
      %p138 = por %p136, %p137
      %s140 = sadd.s32 %s139, 1
      %p143 = scmp.eq.s32.totalorder %s21, 3
      %p144 = scmp.ne.s32.totalorder %s139, %s141
      %p145 = scmp.eq.s32.totalorder %s21, 0
      %p146 = por %p144, %p145
      %p147 = scmp.ne.s32.totalorder %s139, %s141
      %p148 = scmp.eq.s32.totalorder %s26, 3
      %p149 = por %p147, %p148
      %p150 = scmp.ne.s32.totalorder %s141, %s142
      %p151 = scmp.eq.s32.totalorder %s26, 0
      %p152 = por %p150, %p151
      %p153 = scmp.ne.s32.totalorder %s141, %s142
      %p154 = scmp.eq.s32.totalorder %s27, 3
      %p155 = por %p153, %p154
      %p157 = scmp.ne.s32.totalorder %s142, %s156
      %p158 = scmp.eq.s32.totalorder %s27, 0
      %p159 = por %p157, %p158
      %s161 = sadd.s32 %s160, 1
      %p164 = scmp.eq.s32.totalorder %s21, 3
      %p165 = scmp.ne.s32.totalorder %s160, %s162
      %p166 = scmp.eq.s32.totalorder %s21, 0
      %p167 = por %p165, %p166
      %p168 = scmp.ne.s32.totalorder %s160, %s162
      %p169 = scmp.eq.s32.totalorder %s26, 3
      %p170 = por %p168, %p169
      %p171 = scmp.ne.s32.totalorder %s162, %s163
      %p172 = scmp.eq.s32.totalorder %s26, 0
      %p173 = por %p171, %p172
      %p174 = scmp.ne.s32.totalorder %s162, %s163
      %p175 = scmp.eq.s32.totalorder %s27, 3
      %p176 = por %p174, %p175
      %p178 = scmp.ne.s32.totalorder %s163, %s177
      %p179 = scmp.eq.s32.totalorder %s27, 0
      %p180 = por %p178, %p179
      %s181 = ssub.s32 %s21, %s28
      %p182 = scmp.eq.s32.totalorder %s181, 0
      %s184 = sadd.s32 %s183, 1
      %s185 = scalar_select %p182, %s183, %s184
      %p188 = pneg %p182
      %p189 = scmp.eq.s32.totalorder %s21, 3
      %p190 = por %p188, %p189
      %p191 = scmp.ne.s32.totalorder %s183, %s186
      %p192 = scmp.eq.s32.totalorder %s21, 0
      %p193 = por %p191, %p192
      %p194 = scmp.ne.s32.totalorder %s183, %s186
      %p195 = scmp.eq.s32.totalorder %s26, 3
      %p196 = por %p194, %p195
      %p197 = scmp.ne.s32.totalorder %s186, %s187
      %p198 = scmp.eq.s32.totalorder %s26, 0
      %p199 = por %p197, %p198
      %p200 = scmp.ne.s32.totalorder %s186, %s187
      %p201 = scmp.eq.s32.totalorder %s27, 3
      %p202 = por %p200, %p201
      %p204 = scmp.ne.s32.totalorder %s187, %s203
      %p205 = scmp.eq.s32.totalorder %s27, 0
      %p206 = por %p204, %p205
      %p207 = scmp.le.s32.totalorder 1, %s21
      %p208 = scmp.lt.s32.totalorder %s21, 5
      %p209 = pnand %p207, %p208
      %p210 = pneg %p209
      // Predicated region
      $region9: #{tpu_custom_call.1} parent=5 // pred_check
        _
      $region10: #{tpu_custom_call.1} parent=5 // pred_check_branch
        %212 = sbr.rel (%p209) target = $region12
      $region11: #{tpu_custom_call.1} parent=5 // pred_region
        %s213 = ssub.s32 %s21, 1
        // Predicated region
        $region13: #{tpu_custom_call.1} parent=11 // pred_check
          %p214 = pneg %p68
        $region14: #{tpu_custom_call.1} parent=11 // pred_check_branch
          %216 = sbr.rel (%p214) target = $region16
        $region15: #{tpu_custom_call.1} parent=11 // pred_region
          %s218 = ssub.s32 1024, 1024
          %219 = vsyncadd [#allocation6], %s218
          %s220 = sshll.u32 [#allocation5], 4
          %s221 = int_to_ptr.vmem [resolvable:$true] %s220
          %226 = dma.hbm_to_vmem [thread:$0]  %s1, 1024, %s221, [#allocation6], 64, 64, 4
        $region16: #{tpu_custom_call.1} parent=11 // pred_fallthru
          _
        // Predicated region
        $region17: #{tpu_custom_call.1} parent=11 // pred_check
          %p227 = pneg %p89
        $region18: #{tpu_custom_call.1} parent=11 // pred_check_branch
          %229 = sbr.rel (%p227) target = $region20
        $region19: #{tpu_custom_call.1} parent=11 // pred_region
          _
        $region20: #{tpu_custom_call.1} parent=11 // pred_fallthru
          _
        // Predicated region
        $region21: #{tpu_custom_call.1} parent=11 // pred_check
          %p230 = pneg %p110
        $region22: #{tpu_custom_call.1} parent=11 // pred_check_branch
          %232 = sbr.rel (%p230) target = $region24
        $region23: #{tpu_custom_call.1} parent=11 // pred_region
          %s234 = ssub.s32 1024, 1024
          %235 = vsyncadd [#allocation6], %s234
          %s236 = sshll.u32 [#allocation7], 4
          %s237 = int_to_ptr.vmem [resolvable:$true] %s236
          %242 = dma.hbm_to_vmem [thread:$0]  %s3, 1024, %s237, [#allocation6], 64, 64, 4
        $region24: #{tpu_custom_call.1} parent=11 // pred_fallthru
          _
        // Predicated region
        $region25: #{tpu_custom_call.1} parent=11 // pred_check
          %p243 = pneg %p131
        $region26: #{tpu_custom_call.1} parent=11 // pred_check_branch
          %245 = sbr.rel (%p243) target = $region28
        $region27: #{tpu_custom_call.1} parent=11 // pred_region
          _
        $region28: #{tpu_custom_call.1} parent=11 // pred_fallthru
          _
        // Predicated region
        $region29: #{tpu_custom_call.1} parent=11 // pred_check
          %p246 = pneg %p152
        $region30: #{tpu_custom_call.1} parent=11 // pred_check_branch
          %248 = sbr.rel (%p246) target = $region32
        $region31: #{tpu_custom_call.1} parent=11 // pred_region
          %s250 = ssub.s32 1024, 1024
          %251 = vsyncadd [#allocation9], %s250
          %s252 = sshll.u32 [#allocation8], 4
          %s253 = int_to_ptr.vmem [resolvable:$true] %s252
          %258 = dma.hbm_to_vmem [thread:$0]  %s5, 1024, %s253, [#allocation9], 64, 64, 4
        $region32: #{tpu_custom_call.1} parent=11 // pred_fallthru
          _
        // Predicated region
        $region33: #{tpu_custom_call.1} parent=11 // pred_check
          %p259 = pneg %p173
        $region34: #{tpu_custom_call.1} parent=11 // pred_check_branch
          %261 = sbr.rel (%p259) target = $region36
        $region35: #{tpu_custom_call.1} parent=11 // pred_region
          _
        $region36: #{tpu_custom_call.1} parent=11 // pred_fallthru
          _
      $region12: #{tpu_custom_call.1} parent=5 // pred_fallthru
        _
      %p262 = scmp.lt.s32.totalorder %s21, 4
      // Predicated region
      $region37: #{tpu_custom_call.1} parent=5 // pred_check
        %p263 = pneg %p262
      $region38: #{tpu_custom_call.1} parent=5 // pred_check_branch
        %265 = sbr.rel (%p263) target = $region40
      $region39: #{tpu_custom_call.1} parent=5 // pred_region
        // Predicated region
        $region41: #{tpu_custom_call.1} parent=39 // pred_check
          %p266 = pneg %p41
        $region42: #{tpu_custom_call.1} parent=39 // pred_check_branch
          %268 = sbr.rel (%p266) target = $region44
        $region43: #{tpu_custom_call.1} parent=39 // pred_region
          %s269 = sand.u32 %s31, 1
          %s270 = scalar_lea.sflag [#allocation3], %s269
          %s271 = sand.u32 %s31, 1
          %s272 = smul.addr %s271, 8
          %s273 = scalar_lea.vmem [#allocation2], %s272
          %s274 = smul.u32 2, %s21
          %s276 = ssub.s32 128, 128
          %277 = vsyncadd %s270, %s276
          %s278 = smul.addr %s274, 64
          %s279 = scalar_lea.hbm %s0, %s278
          %s280 = sshll.u32 %s273, 4
          %s281 = int_to_ptr.vmem [resolvable:$true] %s280
          %286 = dma.hbm_to_vmem [thread:$0]  %s279, 128, %s281, %s270, 64, 64, 4
        $region44: #{tpu_custom_call.1} parent=39 // pred_fallthru
          _
      $region40: #{tpu_custom_call.1} parent=5 // pred_fallthru
        _
      %p287 = scmp.le.s32.totalorder 1, %s21
      %p288 = scmp.lt.s32.totalorder %s21, 5
      %p289 = pnand %p287, %p288
      %p290 = pneg %p289
      // Predicated region
      $region45: #{tpu_custom_call.1} parent=5 // pred_check
        _
      $region46: #{tpu_custom_call.1} parent=5 // pred_check_branch
        %292 = sbr.rel (%p289) target = $region48
      $region47: #{tpu_custom_call.1} parent=5 // pred_region
        %s293 = ssub.s32 %s21, 1
        %s294 = sand.u32 %s34, 1
        %s295 = scalar_lea.sflag [#allocation3], %s294
        %s296 = sand.u32 %s34, 1
        %s297 = smul.addr %s296, 8
        %s298 = scalar_lea.vmem [#allocation2], %s297
        // Predicated region
        $region49: #{tpu_custom_call.1} parent=47 // pred_check
          %p299 = pneg %p47
        $region50: #{tpu_custom_call.1} parent=47 // pred_check_branch
          %301 = sbr.rel (%p299) target = $region52
        $region51: #{tpu_custom_call.1} parent=47 // pred_region
          %302 = dma.done %s295, 128
        $region52: #{tpu_custom_call.1} parent=47 // pred_fallthru
          _
        // Predicated region
        $region53: #{tpu_custom_call.1} parent=47 // pred_check
          %p303 = pneg %p68
        $region54: #{tpu_custom_call.1} parent=47 // pred_check_branch
          %305 = sbr.rel (%p303) target = $region56
        $region55: #{tpu_custom_call.1} parent=47 // pred_region
          %306 = dma.done [#allocation6], 1024
        $region56: #{tpu_custom_call.1} parent=47 // pred_fallthru
          _
        // Predicated region
        $region57: #{tpu_custom_call.1} parent=47 // pred_check
          %p307 = pneg %p110
        $region58: #{tpu_custom_call.1} parent=47 // pred_check_branch
          %309 = sbr.rel (%p307) target = $region60
        $region59: #{tpu_custom_call.1} parent=47 // pred_region
          %310 = dma.done [#allocation6], 1024
        $region60: #{tpu_custom_call.1} parent=47 // pred_fallthru
          _
        // Predicated region
        $region61: #{tpu_custom_call.1} parent=47 // pred_check
          %p311 = pneg %p152
        $region62: #{tpu_custom_call.1} parent=47 // pred_check_branch
          %313 = sbr.rel (%p311) target = $region64
        $region63: #{tpu_custom_call.1} parent=47 // pred_region
          %314 = dma.done [#allocation9], 1024
        $region64: #{tpu_custom_call.1} parent=47 // pred_fallthru
          _
        %s315 = sand.u32 %s34, 1
        %s316 = scalar_lea.sflag [#allocation3], %s315
        %s317 = sand.u32 %s34, 1
        %s318 = smul.addr %s317, 8
        %s319 = scalar_lea.vmem [#allocation2], %s318
        %p320 = pneg %p47
        %p321 = pneg %p44
        %p322 = pneg %p68
        %p323 = pneg %p65
        %p324 = pneg %p89
        %p325 = pneg %p86
        %p326 = pneg %p110
        %p327 = pneg %p107
        %p328 = pneg %p131
        %p329 = pneg %p128
        %p330 = pneg %p152
        %p331 = pneg %p149
        %p332 = pneg %p173
        %p333 = pneg %p170
        %p334 = pneg %p199
        %p335 = pneg %p196
        %s336 = sand.u32 %s186, 1
        %s337 = scalar_lea.sflag [#allocation4], %s336
        %s338 = sand.u32 %s186, 1
        %s339 = smul.addr %s338, 16
        %s340 = scalar_lea.vmem [#allocation10], %s339
        %s341 = smul.u32 2, %s26
        %s342 = smul.u32 2, %s26
        %v344 = vld [vmem:[%s298] sm:$0xf]
        %v345 = vld [vmem:[%s298 + $0x4] sm:$0xf]
        %v346 = vld [vmem:[#allocation5] sm:$0xf]
        %v347 = vld [vmem:[#allocation5 + $0x4] sm:$0xf]
        %v348 = vld [vmem:[#allocation5 + $0x8] sm:$0xf]
        %v349 = vld [vmem:[#allocation5 + $0xc] sm:$0xf]
        %v350 = vld [vmem:[#allocation5 + $0x10] sm:$0xf]
        %v351 = vld [vmem:[#allocation5 + $0x14] sm:$0xf]
        %v352 = vld [vmem:[#allocation5 + $0x18] sm:$0xf]
        %v353 = vld [vmem:[#allocation5 + $0x1c] sm:$0xf]
        %v354 = vld [vmem:[#allocation5 + $0x20] sm:$0xf]
        %v355 = vld [vmem:[#allocation5 + $0x24] sm:$0xf]
        %v356 = vld [vmem:[#allocation5 + $0x28] sm:$0xf]
        %v357 = vld [vmem:[#allocation5 + $0x2c] sm:$0xf]
        %v358 = vld [vmem:[#allocation5 + $0x30] sm:$0xf]
        %v359 = vld [vmem:[#allocation5 + $0x34] sm:$0xf]
        %v360 = vld [vmem:[#allocation5 + $0x38] sm:$0xf]
        %v361 = vld [vmem:[#allocation5 + $0x3c] sm:$0xf]
        %v362 = vld [vmem:[%s2] sm:$0x1]
        %v364 = vlaneseq
        %v365 = vshrl.u32 %v364, 7
        %v366 = vsub.s32 0, %v365
        %v367 = vrot.slane %v362, %v366
        %v371 = vunpack.c.l.b16 %v344
        %v372 = vunpack.c.l.b16 %v345
        %v373 = vpack.c.b16 %v372, %v371
        %v391 = vunpack.c.l.b16 %v346
        %v392 = vunpack.c.l.b16 %v347
        %v393 = vunpack.c.l.b16 %v348
        %v394 = vunpack.c.l.b16 %v349
        %v395 = vunpack.c.l.b16 %v350
        %v396 = vunpack.c.l.b16 %v351
        %v397 = vunpack.c.l.b16 %v352
        %v398 = vunpack.c.l.b16 %v353
        %v399 = vunpack.c.l.b16 %v354
        %v400 = vunpack.c.l.b16 %v355
        %v401 = vunpack.c.l.b16 %v356
        %v402 = vunpack.c.l.b16 %v357
        %v403 = vunpack.c.l.b16 %v358
        %v404 = vunpack.c.l.b16 %v359
        %v405 = vunpack.c.l.b16 %v360
        %v406 = vunpack.c.l.b16 %v361
        %v407 = vpack.c.b16 %v392, %v391
        %v408 = vpack.c.b16 %v394, %v393
        %v409 = vpack.c.b16 %v396, %v395
        %v410 = vpack.c.b16 %v398, %v397
        %v411 = vpack.c.b16 %v400, %v399
        %v412 = vpack.c.b16 %v402, %v401
        %v413 = vpack.c.b16 %v404, %v403
        %v414 = vpack.c.b16 %v406, %v405
        %423 = vmatprep.subr.bf16.mxu0 0
        %424 = vmatpush1.bf16.msra.mxu0 %v414
        %425 = vmatprep.subr.bf16.mxu0 0
        %426 = vmatpush1.bf16.msra.mxu0 %v413
        %427 = vmatprep.subr.bf16.mxu0 0
        %428 = vmatpush1.bf16.msra.mxu0 %v412
        %429 = vmatprep.subr.bf16.mxu0 0
        %430 = vmatpush1.bf16.msra.mxu0 %v411
        %431 = vmatprep.subr.bf16.mxu0 0
        %432 = vmatpush1.bf16.msra.mxu0 %v410
        %433 = vmatprep.subr.bf16.mxu0 0
        %434 = vmatpush1.bf16.msra.mxu0 %v409
        %435 = vmatprep.subr.bf16.mxu0 0
        %436 = vmatpush1.bf16.msra.mxu0 %v408
        %437 = vmatprep.subr.bf16.mxu0 0
        %438 = vmatpush1.bf16.msra.mxu0 %v407
        %439 = vmatprep.subr.bf16.mxu0 0
        %440 = vmatpush2.bf16.msra.mxu0 0
        %441 = vmatprep.subr.bf16.mxu0 0
        %442 = vmatpush2.bf16.msra.mxu0 0
        %443 = vmatprep.subr.bf16.mxu0 0
        %444 = vmatpush2.bf16.msra.mxu0 0
        %445 = vmatprep.subr.bf16.mxu0 0
        %446 = vmatpush2.bf16.msra.mxu0 0
        %447 = vmatprep.subr.bf16.mxu0 0
        %448 = vmatpush2.bf16.msra.mxu0 0
        %449 = vmatprep.subr.bf16.mxu0 0
        %450 = vmatpush2.bf16.msra.mxu0 0
        %451 = vmatprep.subr.bf16.mxu0 0
        %452 = vmatpush2.bf16.msra.mxu0 0
        %453 = vmatprep.subr.bf16.mxu0 0
        %454 = vmatpush2.bf16.msra.mxu0 0
        %455 = vmatprep.mubr.bf16.mxu0 0
        %456 = vmatmul.mubr.bf16.gmra.mxu0 %v373
        %v457 = vpop.f32.mrf.mxu0
        %v458 = vadd.f32 %v367, %v457
        %v459 = vpop.f32.mrf.mxu0
        %v460 = vpop.f32.mrf.mxu0
        %v461 = vadd.f32 %v367, %v460
        %v462 = vpop.f32.mrf.mxu0
        %463 = vdwg.mxu0
        %vm464 = vcmp.ge.f32.partialorder %v458, 0.0
        %vm465 = vcmp.ge.f32.partialorder %v461, 0.0
        %v466 = vmul.f32 %v458, 0.2
        %v467 = vmul.f32 %v461, 0.2
        %v468 = vsel %vm464, %v458, %v466
        %v469 = vsel %vm465, %v461, %v467
        %v470 = vpack.c.bf16 %v469, %v468
        %v471 = vld [vmem:[#allocation7] sm:$0xf]
        %v472 = vld [vmem:[#allocation7 + $0x4] sm:$0xf]
        %v473 = vld [vmem:[#allocation7 + $0x8] sm:$0xf]
        %v474 = vld [vmem:[#allocation7 + $0xc] sm:$0xf]
        %v475 = vld [vmem:[#allocation7 + $0x10] sm:$0xf]
        %v476 = vld [vmem:[#allocation7 + $0x14] sm:$0xf]
        %v477 = vld [vmem:[#allocation7 + $0x18] sm:$0xf]
        %v478 = vld [vmem:[#allocation7 + $0x1c] sm:$0xf]
        %v479 = vld [vmem:[#allocation7 + $0x20] sm:$0xf]
        %v480 = vld [vmem:[#allocation7 + $0x24] sm:$0xf]
        %v481 = vld [vmem:[#allocation7 + $0x28] sm:$0xf]
        %v482 = vld [vmem:[#allocation7 + $0x2c] sm:$0xf]
        %v483 = vld [vmem:[#allocation7 + $0x30] sm:$0xf]
        %v484 = vld [vmem:[#allocation7 + $0x34] sm:$0xf]
        %v485 = vld [vmem:[#allocation7 + $0x38] sm:$0xf]
        %v486 = vld [vmem:[#allocation7 + $0x3c] sm:$0xf]
        %v487 = vld [vmem:[%s4] sm:$0x1]
        %v489 = vlaneseq
        %v490 = vshrl.u32 %v489, 7
        %v491 = vsub.s32 0, %v490
        %v492 = vrot.slane %v487, %v491
        %v510 = vunpack.c.l.b16 %v471
        %v511 = vunpack.c.l.b16 %v472
        %v512 = vunpack.c.l.b16 %v473
        %v513 = vunpack.c.l.b16 %v474
        %v514 = vunpack.c.l.b16 %v475
        %v515 = vunpack.c.l.b16 %v476
        %v516 = vunpack.c.l.b16 %v477
        %v517 = vunpack.c.l.b16 %v478
        %v518 = vunpack.c.l.b16 %v479
        %v519 = vunpack.c.l.b16 %v480
        %v520 = vunpack.c.l.b16 %v481
        %v521 = vunpack.c.l.b16 %v482
        %v522 = vunpack.c.l.b16 %v483
        %v523 = vunpack.c.l.b16 %v484
        %v524 = vunpack.c.l.b16 %v485
        %v525 = vunpack.c.l.b16 %v486
        %v526 = vpack.c.b16 %v511, %v510
        %v527 = vpack.c.b16 %v513, %v512
        %v528 = vpack.c.b16 %v515, %v514
        %v529 = vpack.c.b16 %v517, %v516
        %v530 = vpack.c.b16 %v519, %v518
        %v531 = vpack.c.b16 %v521, %v520
        %v532 = vpack.c.b16 %v523, %v522
        %v533 = vpack.c.b16 %v525, %v524
        %542 = vmatprep.subr.bf16.mxu0 0
        %543 = vmatpush1.bf16.msra.mxu0 %v533
        %544 = vmatprep.subr.bf16.mxu0 0
        %545 = vmatpush1.bf16.msra.mxu0 %v532
        %546 = vmatprep.subr.bf16.mxu0 0
        %547 = vmatpush1.bf16.msra.mxu0 %v531
        %548 = vmatprep.subr.bf16.mxu0 0
        %549 = vmatpush1.bf16.msra.mxu0 %v530
        %550 = vmatprep.subr.bf16.mxu0 0
        %551 = vmatpush1.bf16.msra.mxu0 %v529
        %552 = vmatprep.subr.bf16.mxu0 0
        %553 = vmatpush1.bf16.msra.mxu0 %v528
        %554 = vmatprep.subr.bf16.mxu0 0
        %555 = vmatpush1.bf16.msra.mxu0 %v527
        %556 = vmatprep.subr.bf16.mxu0 0
        %557 = vmatpush1.bf16.msra.mxu0 %v526
        %558 = vmatprep.subr.bf16.mxu0 0
        %559 = vmatpush2.bf16.msra.mxu0 0
        %560 = vmatprep.subr.bf16.mxu0 0
        %561 = vmatpush2.bf16.msra.mxu0 0
        %562 = vmatprep.subr.bf16.mxu0 0
        %563 = vmatpush2.bf16.msra.mxu0 0
        %564 = vmatprep.subr.bf16.mxu0 0
        %565 = vmatpush2.bf16.msra.mxu0 0
        %566 = vmatprep.subr.bf16.mxu0 0
        %567 = vmatpush2.bf16.msra.mxu0 0
        %568 = vmatprep.subr.bf16.mxu0 0
        %569 = vmatpush2.bf16.msra.mxu0 0
        %570 = vmatprep.subr.bf16.mxu0 0
        %571 = vmatpush2.bf16.msra.mxu0 0
        %572 = vmatprep.subr.bf16.mxu0 0
        %573 = vmatpush2.bf16.msra.mxu0 0
        %574 = vmatprep.mubr.bf16.mxu0 0
        %575 = vmatmul.mubr.bf16.gmra.mxu0 %v470
        %v576 = vpop.f32.mrf.mxu0
        %v577 = vadd.f32 %v492, %v576
        %v578 = vpop.f32.mrf.mxu0
        %v579 = vpop.f32.mrf.mxu0
        %v580 = vadd.f32 %v492, %v579
        %v581 = vpop.f32.mrf.mxu0
        %582 = vdwg.mxu0
        %vm583 = vcmp.ge.f32.partialorder %v577, 0.0
        %vm584 = vcmp.ge.f32.partialorder %v580, 0.0
        %v585 = vmul.f32 %v577, 0.2
        %v586 = vmul.f32 %v580, 0.2
        %v587 = vsel %vm583, %v577, %v585
        %v588 = vsel %vm584, %v580, %v586
        %v589 = vpack.c.bf16 %v588, %v587
        %v590 = vld [vmem:[#allocation8] sm:$0xf]
        %v591 = vld [vmem:[#allocation8 + $0x4] sm:$0xf]
        %v592 = vld [vmem:[#allocation8 + $0x8] sm:$0xf]
        %v593 = vld [vmem:[#allocation8 + $0xc] sm:$0xf]
        %v594 = vld [vmem:[#allocation8 + $0x10] sm:$0xf]
        %v595 = vld [vmem:[#allocation8 + $0x14] sm:$0xf]
        %v596 = vld [vmem:[#allocation8 + $0x18] sm:$0xf]
        %v597 = vld [vmem:[#allocation8 + $0x1c] sm:$0xf]
        %v598 = vld [vmem:[#allocation8 + $0x20] sm:$0xf]
        %v599 = vld [vmem:[#allocation8 + $0x24] sm:$0xf]
        %v600 = vld [vmem:[#allocation8 + $0x28] sm:$0xf]
        %v601 = vld [vmem:[#allocation8 + $0x2c] sm:$0xf]
        %v602 = vld [vmem:[#allocation8 + $0x30] sm:$0xf]
        %v603 = vld [vmem:[#allocation8 + $0x34] sm:$0xf]
        %v604 = vld [vmem:[#allocation8 + $0x38] sm:$0xf]
        %v605 = vld [vmem:[#allocation8 + $0x3c] sm:$0xf]
        %v606 = vld [vmem:[%s6] sm:$0x1]
        %v608 = vlaneseq
        %v609 = vshrl.u32 %v608, 7
        %v610 = vsub.s32 0, %v609
        %v611 = vrot.slane %v606, %v610
        %v629 = vunpack.c.l.b16 %v590
        %v630 = vunpack.c.l.b16 %v591
        %v631 = vunpack.c.l.b16 %v592
        %v632 = vunpack.c.l.b16 %v593
        %v633 = vunpack.c.l.b16 %v594
        %v634 = vunpack.c.l.b16 %v595
        %v635 = vunpack.c.l.b16 %v596
        %v636 = vunpack.c.l.b16 %v597
        %v637 = vunpack.c.l.b16 %v598
        %v638 = vunpack.c.l.b16 %v599
        %v639 = vunpack.c.l.b16 %v600
        %v640 = vunpack.c.l.b16 %v601
        %v641 = vunpack.c.l.b16 %v602
        %v642 = vunpack.c.l.b16 %v603
        %v643 = vunpack.c.l.b16 %v604
        %v644 = vunpack.c.l.b16 %v605
        %v645 = vpack.c.b16 %v630, %v629
        %v646 = vpack.c.b16 %v632, %v631
        %v647 = vpack.c.b16 %v634, %v633
        %v648 = vpack.c.b16 %v636, %v635
        %v649 = vpack.c.b16 %v638, %v637
        %v650 = vpack.c.b16 %v640, %v639
        %v651 = vpack.c.b16 %v642, %v641
        %v652 = vpack.c.b16 %v644, %v643
        %661 = vmatprep.subr.bf16.mxu0 0
        %662 = vmatpush1.bf16.msra.mxu0 %v652
        %663 = vmatprep.subr.bf16.mxu0 0
        %664 = vmatpush1.bf16.msra.mxu0 %v651
        %665 = vmatprep.subr.bf16.mxu0 0
        %666 = vmatpush1.bf16.msra.mxu0 %v650
        %667 = vmatprep.subr.bf16.mxu0 0
        %668 = vmatpush1.bf16.msra.mxu0 %v649
        %669 = vmatprep.subr.bf16.mxu0 0
        %670 = vmatpush1.bf16.msra.mxu0 %v648
        %671 = vmatprep.subr.bf16.mxu0 0
        %672 = vmatpush1.bf16.msra.mxu0 %v647
        %673 = vmatprep.subr.bf16.mxu0 0
        %674 = vmatpush1.bf16.msra.mxu0 %v646
        %675 = vmatprep.subr.bf16.mxu0 0
        %676 = vmatpush1.bf16.msra.mxu0 %v645
        %677 = vmatprep.subr.bf16.mxu0 0
        %678 = vmatpush2.bf16.msra.mxu0 0
        %679 = vmatprep.subr.bf16.mxu0 0
        %680 = vmatpush2.bf16.msra.mxu0 0
        %681 = vmatprep.subr.bf16.mxu0 0
        %682 = vmatpush2.bf16.msra.mxu0 0
        %683 = vmatprep.subr.bf16.mxu0 0
        %684 = vmatpush2.bf16.msra.mxu0 0
        %685 = vmatprep.subr.bf16.mxu0 0
        %686 = vmatpush2.bf16.msra.mxu0 0
        %687 = vmatprep.subr.bf16.mxu0 0
        %688 = vmatpush2.bf16.msra.mxu0 0
        %689 = vmatprep.subr.bf16.mxu0 0
        %690 = vmatpush2.bf16.msra.mxu0 0
        %691 = vmatprep.subr.bf16.mxu0 0
        %692 = vmatpush2.bf16.msra.mxu0 0
        %693 = vmatprep.mubr.bf16.mxu0 0
        %694 = vmatmul.mubr.bf16.gmra.mxu0 %v589
        %v695 = vpop.f32.mrf.mxu0
        %v696 = vadd.f32 %v611, %v695
        %v697 = vpop.f32.mrf.mxu0
        %v698 = vpop.f32.mrf.mxu0
        %v699 = vadd.f32 %v611, %v698
        %v700 = vpop.f32.mrf.mxu0
        %701 = vdwg.mxu0
        %v702 = vsub.f32 0.0, %v696
        %v703 = vsub.f32 0.0, %v699
        %v704 = vmul.f32 %v702, 1.442695
        %v705 = vpow.pop %v704
        %v706 = vmul.f32 %v703, 1.442695
        %v707 = vpow.pop %v706
        %v708 = vadd.f32 %v705, 1.0
        %v709 = vadd.f32 %v707, 1.0
        %v710 = vrcp.pop %v708
        %v711 = vmul.f32 1.0, %v710
        %v712 = vrcp.pop %v709
        %v713 = vmul.f32 1.0, %v712
        %714 = vst [vmem:[%s340] sm:$0xff] %v711
        %715 = vst [vmem:[%s340 + $0x8] sm:$0xff] %v713
        %s716 = sand.u32 %s186, 1
        %s717 = scalar_lea.sflag [#allocation4], %s716
        %s718 = sand.u32 %s186, 1
        %s719 = smul.addr %s718, 16
        %s720 = scalar_lea.vmem [#allocation10], %s719
        // Predicated region
        $region65: #{tpu_custom_call.1} parent=47 // pred_check
          %p721 = pneg %p196
        $region66: #{tpu_custom_call.1} parent=47 // pred_check_branch
          %723 = sbr.rel (%p721) target = $region68
        $region67: #{tpu_custom_call.1} parent=47 // pred_region
          %s724 = smul.u32 2, %s26
          %s726 = ssub.s32 256, 256
          %727 = vsyncadd %s717, %s726
          %s728 = smul.addr %s724, 128
          %s729 = scalar_lea.hbm %s7, %s728
          %s730 = sshll.u32 %s720, 4
          %s731 = int_to_ptr.vmem [resolvable:$true] %s730
          %736 = dma.vmem_to_hbm [thread:$0]  %s731, 256, %s729, %s717, 128, 128, 8
        $region68: #{tpu_custom_call.1} parent=47 // pred_fallthru
          _
      $region48: #{tpu_custom_call.1} parent=5 // pred_fallthru
        _
      %p737 = scmp.le.s32.totalorder 2, %s21
      // Predicated region
      $region69: #{tpu_custom_call.1} parent=5 // pred_check
        %p738 = pneg %p737
      $region70: #{tpu_custom_call.1} parent=5 // pred_check_branch
        %740 = sbr.rel (%p738) target = $region72
      $region71: #{tpu_custom_call.1} parent=5 // pred_region
        %s741 = ssub.s32 %s21, 2
        // Predicated region
        $region73: #{tpu_custom_call.1} parent=71 // pred_check
          %p742 = pneg %p202
        $region74: #{tpu_custom_call.1} parent=71 // pred_check_branch
          %744 = sbr.rel (%p742) target = $region76
        $region75: #{tpu_custom_call.1} parent=71 // pred_region
          %s745 = sand.u32 %s187, 1
          %s746 = scalar_lea.sflag [#allocation4], %s745
          %s747 = sand.u32 %s187, 1
          %s748 = smul.addr %s747, 16
          %s749 = scalar_lea.vmem [#allocation10], %s748
          %750 = dma.done %s746, 256
        $region76: #{tpu_custom_call.1} parent=71 // pred_fallthru
          _
      $region72: #{tpu_custom_call.1} parent=5 // pred_fallthru
        _
    $region6: #{tpu_custom_call.1} parent=1 // loop_footer
      %s25 = sadd.s32 1, %s21
    $region7: #{tpu_custom_call.1} parent=1 // loop_footer_branch
      %20 = sbr.rel target = $region3
    $region8: #{tpu_custom_call.1} parent=1 // loop_exit
      _
    %751 = vsyncpa [#allocation3], 1
    %s752 = scalar_lea.sflag [#allocation3], 1
    %753 = vsyncpa %s752, 1
    %754 = vsyncpa [#allocation6], 1
    %755 = vsyncpa [#allocation9], 1
    %756 = vsyncpa [#allocation4], 1
    %s757 = scalar_lea.sflag [#allocation4], 1
    %758 = vsyncpa %s757, 1

</llo_original>
